<compile_context>
chip_gen: v6e
topology: v6e:2x2x1
jax: 0.10.0
libtpu: 0.0.40
codegen_flags: <defaults>
</compile_context>

<pallas_src>
import jax
import jax.numpy as jnp
from jax.experimental import pallas as pl
from jax.experimental.pallas import tpu as pltpu

# Small, module-consistent hyperparameters (scaled down from hp.*):
SEQ    = 8          # Nmax + 1
BATCH  = 2
BP     = 8          # batch padded to a full sublane tile
NZ     = 32         # hp.Nz
H      = 64         # hp.dec_hidden_size
M      = 20         # hp.M (number of mixture components)
IN_DIM = NZ + 5     # LSTM input size (37)
IN_PAD = 64         # LSTM input size padded for an aligned matmul K dim
NPARAM = 6 * M + 3  # fc_params output size (123)
HEAD_W = 128        # lane-dense padded head width
NP     = SEQ * BP   # padded flattened rows (64)


def decoder_kernel(x_ref, z_ref, w_hc_ref, b_hc_ref, w_ih_ref, b_g_ref,
                   w_hh_ref, w_p_ref, b_p_ref, heads_ref, hc_ref, hs_ref):
    f32, bf16 = jnp.float32, jnp.bfloat16

    # hidden, cell = split(tanh(fc_hc(z)), H, dim=1)
    hc0 = jnp.tanh(jnp.dot(z_ref[...].astype(bf16), w_hc_ref[...],
                           preferred_element_type=f32) + b_hc_ref[...])
    h = hc0[:, :H]
    c = hc0[:, H:]

    # Hoisted input projection + both LSTM biases: one (NP, IN_PAD)@(IN_PAD, 4H) matmul.
    xw = jnp.dot(x_ref[...].astype(bf16), w_ih_ref[...],
                 preferred_element_type=f32) + b_g_ref[...]           # (NP, 4H)

    # Loop-invariant bf16 RHS of the recurrent matmul (PyTorch gate order i,f,g,o).
    w_hh = w_hh_ref[...]
    # SEQ is a compile-time constant -> fully unrolled; row slices are full 8-row tiles.
    for t in range(SEQ):
        gates = xw[t * BP:(t + 1) * BP, :] + jnp.dot(
            h.astype(bf16), w_hh, preferred_element_type=f32)         # (BP, 4H)
        # Fused activations: one sigmoid pass over the full slab, one tanh on g.
        sig = jax.nn.sigmoid(gates)
        g_g = jnp.tanh(gates[:, 2 * H:3 * H])
        c = sig[:, H:2 * H] * c + sig[:, :H] * g_g                    # f*c + i*g
        h = sig[:, 3 * H:] * jnp.tanh(c)                              # o*tanh(c)
        hs_ref[t * BP:(t + 1) * BP, :] = h

    # Final hidden/cell, lane-dense: (BP, 2H) = (8, 128) -> one unmasked store.
    hc_ref[...] = jnp.concatenate([h, c], axis=1)

    # y = fc_params(outputs.view(-1, H)) on the full padded row block.
    y = jnp.dot(hs_ref[...].astype(bf16), w_p_ref[...],
                preferred_element_type=f32) + b_p_ref[...]            # (NP, 128)

    # Head epilogue on the single lane-dense slab
    # [pi | mu_x | mu_y | sigma_x | sigma_y | rho | pen | pad]:
    # ONE exp pass (shifted per softmax group) + ONE tanh pass.
    col = jax.lax.broadcasted_iota(jnp.int32, (NP, HEAD_W), 1)
    pi_mask  = col < M
    sig_mask = (col >= 3 * M) & (col < 5 * M)
    rho_mask = (col >= 5 * M) & (col < 6 * M)
    q_mask   = (col >= 6 * M) & (col < NPARAM)

    pi_max = jnp.max(jnp.where(pi_mask, y, -1e30), axis=-1, keepdims=True)
    q_max  = jnp.max(jnp.where(q_mask,  y, -1e30), axis=-1, keepdims=True)
    shift  = jnp.where(pi_mask, pi_max, jnp.where(q_mask, q_max, 0.0))
    e  = jnp.exp(y - shift)          # == exp(y) on the sigma columns (shift = 0)
    th = jnp.tanh(y)                 # used only on the rho columns

    pi_sum = jnp.sum(jnp.where(pi_mask, e, 0.0), axis=-1, keepdims=True)
    q_sum  = jnp.sum(jnp.where(q_mask,  e, 0.0), axis=-1, keepdims=True)
    inv_pi = pl.reciprocal(pi_sum, approx=True)
    inv_pi = inv_pi * (2.0 - pi_sum * inv_pi)      # one Newton step -> ~exact
    inv_q  = pl.reciprocal(q_sum, approx=True)
    inv_q  = inv_q * (2.0 - q_sum * inv_q)

    vals = y                                       # mu_x, mu_y pass through
    vals = jnp.where(sig_mask, e, vals)            # sigma_x / sigma_y = exp(y)
    vals = jnp.where(rho_mask, th, vals)           # rho = tanh(y)
    vals = jnp.where(pi_mask, e * inv_pi, vals)    # pi softmax
    vals = jnp.where(q_mask,  e * inv_q,  vals)    # pen softmax
    heads_ref[...] = jnp.where(col < NPARAM, vals, 0.0)


def prepare_params(w_hc, b_hc, w_ih, b_ih, w_hh, b_hh, w_p, b_p):
    """One-time (model-load) preprocessing: PyTorch (out,in) weights -> kernel layout,
    matmul operands pre-cast to bf16, fc_params columns permuted + padded to 128,
    LSTM input-weight K dim zero-padded to IN_PAD."""
    bf16 = jnp.bfloat16
    # Interleaved fc_params columns [6*m + k] -> grouped [k*M + m], pen last.
    perm = jnp.array([m * 6 + k for k in range(6) for m in range(M)]
                     + [6 * M, 6 * M + 1, 6 * M + 2], dtype=jnp.int32)
    w_p_g = jnp.zeros((H, HEAD_W), jnp.float32).at[:, :NPARAM].set(w_p.T[:, perm])
    b_p_g = jnp.zeros((HEAD_W,), jnp.float32).at[:NPARAM].set(b_p[perm])
    w_ih_pad = jnp.zeros((IN_PAD, 4 * H), jnp.float32).at[:IN_DIM].set(w_ih.T)
    return (w_hc.T.astype(bf16), b_hc[None, :].astype(jnp.float32),
            w_ih_pad.astype(bf16), (b_ih + b_hh)[None, :].astype(jnp.float32),
            w_hh.T.astype(bf16),
            w_p_g.astype(bf16), b_p_g[None, :].astype(jnp.float32))


@jax.jit
def decoder_forward(inputs, z, w_hc_t, b_hc2, w_ih_t, b_g2, w_hh_t, w_p_t, b_p2):
    """inputs: (SEQ, BATCH, NZ+5), z: (BATCH, NZ); weights preprocessed by prepare_params."""
    # Pad batch 2 -> 8 and input dim 37 -> 64 so every matmul operand / per-step
    # row slice is tile-aligned.
    x_pad = (jnp.zeros((SEQ, BP, IN_PAD), jnp.float32)
             .at[:, :BATCH, :IN_DIM].set(inputs))
    x_flat = x_pad.reshape(NP, IN_PAD)
    z_pad = jnp.zeros((BP, NZ), jnp.float32).at[:BATCH].set(z)

    args = (x_flat, z_pad, w_hc_t, b_hc2, w_ih_t, b_g2, w_hh_t, w_p_t, b_p2)
    out_shapes = [jax.ShapeDtypeStruct((NP, HEAD_W), jnp.float32),  # heads slab
                  jax.ShapeDtypeStruct((BP, 2 * H), jnp.float32)]   # [hidden | cell]
    vmem = pl.BlockSpec(memory_space=pltpu.MemorySpace.VMEM)

    heads, hc = pl.pallas_call(
        decoder_kernel,
        out_shape=out_shapes,
        in_specs=[vmem] * len(args),
        out_specs=[vmem, vmem],
        scratch_shapes=[pltpu.VMEM((NP, H), jnp.float32)],   # per-step hidden history
    )(*args)

    heads = heads.reshape(SEQ, BP, HEAD_W)[:, :BATCH, :]
    pi      = heads[..., 0 * M:1 * M]
    mu_x    = heads[..., 1 * M:2 * M]
    mu_y    = heads[..., 2 * M:3 * M]
    sigma_x = heads[..., 3 * M:4 * M]
    sigma_y = heads[..., 4 * M:5 * M]
    rho_xy  = heads[..., 5 * M:6 * M]
    q       = heads[..., 6 * M:6 * M + 3]
    hidden = hc[:BATCH, :H][None]
    cell   = hc[:BATCH, H:][None]
    return pi, mu_x, mu_y, sigma_x, sigma_y, rho_xy, q, hidden, cell


def reference_forward(inputs, z, w_hc, b_hc, w_ih, b_ih, w_hh, b_hh, w_p, b_p):
    """Pure-JAX f32 transcription of the PyTorch forward (training branch)."""
    hc = jnp.tanh(z @ w_hc.T + b_hc)
    h_t, c_t = hc[:, :H], hc[:, H:]
    outs = []
    for t in range(SEQ):
        gates = inputs[t] @ w_ih.T + b_ih + h_t @ w_hh.T + b_hh
        i_g = jax.nn.sigmoid(gates[:, :H])
        f_g = jax.nn.sigmoid(gates[:, H:2 * H])
        g_g = jnp.tanh(gates[:, 2 * H:3 * H])
        o_g = jax.nn.sigmoid(gates[:, 3 * H:])
        c_t = f_g * c_t + i_g * g_g
        h_t = o_g * jnp.tanh(c_t)
        outs.append(h_t)
    outputs = jnp.stack(outs)                      # (SEQ, BATCH, H)
    y = outputs.reshape(-1, H) @ w_p.T + b_p       # (N, 6M+3)
    chunks = [y[:, i * 6:(i + 1) * 6] for i in range(M)] + [y[:, 6 * M:]]
    mix = jnp.stack(chunks[:-1])                   # (M, N, 6)
    pen = chunks[-1]                               # (N, 3)
    get = lambda k: jnp.transpose(mix[:, :, k])    # (N, M) == transpose(0,1).squeeze()
    pi = jax.nn.softmax(get(0), axis=1).reshape(SEQ, BATCH, M)
    mu_x = get(1).reshape(SEQ, BATCH, M)
    mu_y = get(2).reshape(SEQ, BATCH, M)
    sigma_x = jnp.exp(get(3)).reshape(SEQ, BATCH, M)
    sigma_y = jnp.exp(get(4)).reshape(SEQ, BATCH, M)
    rho_xy = jnp.tanh(get(5)).reshape(SEQ, BATCH, M)
    q = jax.nn.softmax(pen, axis=1).reshape(SEQ, BATCH, 3)
    return pi, mu_x, mu_y, sigma_x, sigma_y, rho_xy, q, h_t[None], c_t[None]


if __name__ == "__main__":
    key = jax.random.PRNGKey(0)
    ks = jax.random.split(key, 10)
    inputs = jax.random.normal(ks[0], (SEQ, BATCH, IN_DIM), jnp.float32)
    z      = jax.random.normal(ks[1], (BATCH, NZ), jnp.float32)
    # Deterministic synthetic parameters (PyTorch layouts: fc weight (out, in)).
    w_hc = 0.1 * jax.random.normal(ks[2], (2 * H, NZ), jnp.float32)
    b_hc = 0.1 * jax.random.normal(ks[3], (2 * H,), jnp.float32)
    w_ih = 0.1 * jax.random.normal(ks[4], (4 * H, IN_DIM), jnp.float32)
    b_ih = 0.1 * jax.random.normal(ks[5], (4 * H,), jnp.float32)
    w_hh = 0.1 * jax.random.normal(ks[6], (4 * H, H), jnp.float32)
    b_hh = 0.1 * jax.random.normal(ks[7], (4 * H,), jnp.float32)
    w_p  = 0.1 * jax.random.normal(ks[8], (NPARAM, H), jnp.float32)
    b_p  = 0.1 * jax.random.normal(ks[9], (NPARAM,), jnp.float32)

    params = (w_hc, b_hc, w_ih, b_ih, w_hh, b_hh, w_p, b_p)

    # One-time preprocessing (model-load time), outside the per-call path.
    prepped = prepare_params(*params)

    out = decoder_forward(inputs, z, *prepped)
    out = jax.block_until_ready(out)

    ref = reference_forward(inputs, z, *params)
    # bf16 MXU operands loosen matching from ~1e-5 (all-f32) to ~1e-2 scale;
    # compare with a mixed abs/rel criterion.
    for a, b in zip(out, ref):
        assert a.shape == b.shape, (a.shape, b.shape)
        err = float(jnp.max(jnp.abs(a - b) / (1.0 + jnp.abs(b))))
        assert err < 2e-2, err

    print("KERNEL_OK")
</pallas_src>

<mosaic_0001>
module attributes {stable_mosaic.version = 11 : i64} {
  func.func @decoder_kernel(%arg0: memref<64x64xf32, #tpu.memory_space<vmem>>, %arg1: memref<8x32xf32, #tpu.memory_space<vmem>>, %arg2: memref<32x128xbf16, #tpu.memory_space<vmem>>, %arg3: memref<1x128xf32, #tpu.memory_space<vmem>>, %arg4: memref<64x256xbf16, #tpu.memory_space<vmem>>, %arg5: memref<1x256xf32, #tpu.memory_space<vmem>>, %arg6: memref<64x256xbf16, #tpu.memory_space<vmem>>, %arg7: memref<64x128xbf16, #tpu.memory_space<vmem>>, %arg8: memref<1x128xf32, #tpu.memory_space<vmem>>, %arg9: memref<64x128xf32, #tpu.memory_space<vmem>>, %arg10: memref<8x128xf32, #tpu.memory_space<vmem>>, %arg11: memref<64x64xf32, #tpu.memory_space<vmem>>) attributes {dimension_semantics = [], scalar_prefetch = 0 : i64, scratch_operands = 1 : i64, tpu.core_type = #tpu.core_type<tc>} {
    %c0 = arith.constant 0 : index
    %c0_0 = arith.constant 0 : index
    %0 = vector.load %arg1[%c0, %c0_0] : memref<8x32xf32, #tpu.memory_space<vmem>>, vector<8x32xf32>
    %1 = arith.truncf %0 : vector<8x32xf32> to vector<8x32xbf16>
    %c0_1 = arith.constant 0 : index
    %c0_2 = arith.constant 0 : index
    %2 = vector.load %arg2[%c0_1, %c0_2] : memref<32x128xbf16, #tpu.memory_space<vmem>>, vector<32x128xbf16>
    %cst = arith.constant dense<0.000000e+00> : vector<8x128xf32>
    %3 = tpu.matmul %1, %2, %cst {dimension_numbers = #tpu.dot_dimension_numbers<[1], [0], [0], [1], [0, 0, 1, 1], [], []>} : vector<8x32xbf16>, vector<32x128xbf16>, vector<8x128xf32> -> vector<8x128xf32>
    %c0_3 = arith.constant 0 : index
    %c0_4 = arith.constant 0 : index
    %4 = vector.load %arg3[%c0_3, %c0_4] : memref<1x128xf32, #tpu.memory_space<vmem>>, vector<1x128xf32>
    %5 = vector.broadcast %4 : vector<1x128xf32> to vector<8x128xf32>
    %6 = arith.addf %3, %5 : vector<8x128xf32>
    %7 = math.tanh %6 : vector<8x128xf32>
    %8 = vector.extract_strided_slice %7 {offsets = [0, 0], sizes = [8, 64], strides = [1, 1]} : vector<8x128xf32> to vector<8x64xf32>
    %9 = vector.extract_strided_slice %7 {offsets = [0, 64], sizes = [8, 64], strides = [1, 1]} : vector<8x128xf32> to vector<8x64xf32>
    %c0_5 = arith.constant 0 : index
    %c0_6 = arith.constant 0 : index
    %10 = vector.load %arg0[%c0_5, %c0_6] : memref<64x64xf32, #tpu.memory_space<vmem>>, vector<64x64xf32>
    %11 = arith.truncf %10 : vector<64x64xf32> to vector<64x64xbf16>
    %c0_7 = arith.constant 0 : index
    %c0_8 = arith.constant 0 : index
    %12 = vector.load %arg4[%c0_7, %c0_8] : memref<64x256xbf16, #tpu.memory_space<vmem>>, vector<64x256xbf16>
    %cst_9 = arith.constant dense<0.000000e+00> : vector<64x256xf32>
    %13 = tpu.matmul %11, %12, %cst_9 {dimension_numbers = #tpu.dot_dimension_numbers<[1], [0], [0], [1], [0, 0, 1, 1], [], []>} : vector<64x64xbf16>, vector<64x256xbf16>, vector<64x256xf32> -> vector<64x256xf32>
    %c0_10 = arith.constant 0 : index
    %c0_11 = arith.constant 0 : index
    %14 = vector.load %arg5[%c0_10, %c0_11] : memref<1x256xf32, #tpu.memory_space<vmem>>, vector<1x256xf32>
    %15 = vector.broadcast %14 : vector<1x256xf32> to vector<64x256xf32>
    %16 = arith.addf %13, %15 : vector<64x256xf32>
    %c0_12 = arith.constant 0 : index
    %c0_13 = arith.constant 0 : index
    %17 = vector.load %arg6[%c0_12, %c0_13] : memref<64x256xbf16, #tpu.memory_space<vmem>>, vector<64x256xbf16>
    %18 = vector.extract_strided_slice %16 {offsets = [0, 0], sizes = [8, 256], strides = [1, 1]} : vector<64x256xf32> to vector<8x256xf32>
    %19 = arith.truncf %8 : vector<8x64xf32> to vector<8x64xbf16>
    %cst_14 = arith.constant dense<0.000000e+00> : vector<8x256xf32>
    %20 = tpu.matmul %19, %17, %cst_14 {dimension_numbers = #tpu.dot_dimension_numbers<[1], [0], [0], [1], [0, 0, 1, 1], [], []>} : vector<8x64xbf16>, vector<64x256xbf16>, vector<8x256xf32> -> vector<8x256xf32>
    %21 = arith.addf %18, %20 : vector<8x256xf32>
    %22 = arith.negf %21 : vector<8x256xf32>
    %23 = math.exp %22 : vector<8x256xf32>
    %cst_15 = arith.constant 1.000000e+00 : f32
    %24 = vector.broadcast %cst_15 : f32 to vector<8x256xf32>
    %25 = arith.addf %24, %23 : vector<8x256xf32>
    %26 = arith.divf %24, %25 : vector<8x256xf32>
    %27 = vector.extract_strided_slice %21 {offsets = [0, 128], sizes = [8, 64], strides = [1, 1]} : vector<8x256xf32> to vector<8x64xf32>
    %28 = math.tanh %27 : vector<8x64xf32>
    %29 = vector.extract_strided_slice %26 {offsets = [0, 64], sizes = [8, 64], strides = [1, 1]} : vector<8x256xf32> to vector<8x64xf32>
    %30 = arith.mulf %29, %9 : vector<8x64xf32>
    %31 = vector.extract_strided_slice %26 {offsets = [0, 0], sizes = [8, 64], strides = [1, 1]} : vector<8x256xf32> to vector<8x64xf32>
    %32 = arith.mulf %31, %28 : vector<8x64xf32>
    %33 = arith.addf %30, %32 : vector<8x64xf32>
    %34 = vector.extract_strided_slice %26 {offsets = [0, 192], sizes = [8, 64], strides = [1, 1]} : vector<8x256xf32> to vector<8x64xf32>
    %35 = math.tanh %33 : vector<8x64xf32>
    %36 = arith.mulf %34, %35 : vector<8x64xf32>
    %c0_16 = arith.constant 0 : index
    %c0_17 = arith.constant 0 : index
    %37 = vector.load %arg11[%c0_16, %c0_17] : memref<64x64xf32, #tpu.memory_space<vmem>>, vector<8x64xf32>
    tpu.vector_store %arg11[%c0_16, %c0_17], %36 {strides = array<i32>} : memref<64x64xf32, #tpu.memory_space<vmem>>, vector<8x64xf32>,
    %38 = vector.extract_strided_slice %16 {offsets = [8, 0], sizes = [8, 256], strides = [1, 1]} : vector<64x256xf32> to vector<8x256xf32>
    %39 = arith.truncf %36 : vector<8x64xf32> to vector<8x64xbf16>
    %cst_18 = arith.constant dense<0.000000e+00> : vector<8x256xf32>
    %40 = tpu.matmul %39, %17, %cst_18 {dimension_numbers = #tpu.dot_dimension_numbers<[1], [0], [0], [1], [0, 0, 1, 1], [], []>} : vector<8x64xbf16>, vector<64x256xbf16>, vector<8x256xf32> -> vector<8x256xf32>
    %41 = arith.addf %38, %40 : vector<8x256xf32>
    %42 = arith.negf %41 : vector<8x256xf32>
    %43 = math.exp %42 : vector<8x256xf32>
    %cst_19 = arith.constant 1.000000e+00 : f32
    %44 = vector.broadcast %cst_19 : f32 to vector<8x256xf32>
    %45 = arith.addf %44, %43 : vector<8x256xf32>
    %46 = arith.divf %44, %45 : vector<8x256xf32>
    %47 = vector.extract_strided_slice %41 {offsets = [0, 128], sizes = [8, 64], strides = [1, 1]} : vector<8x256xf32> to vector<8x64xf32>
    %48 = math.tanh %47 : vector<8x64xf32>
    %49 = vector.extract_strided_slice %46 {offsets = [0, 64], sizes = [8, 64], strides = [1, 1]} : vector<8x256xf32> to vector<8x64xf32>
    %50 = arith.mulf %49, %33 : vector<8x64xf32>
    %51 = vector.extract_strided_slice %46 {offsets = [0, 0], sizes = [8, 64], strides = [1, 1]} : vector<8x256xf32> to vector<8x64xf32>
    %52 = arith.mulf %51, %48 : vector<8x64xf32>
    %53 = arith.addf %50, %52 : vector<8x64xf32>
    %54 = vector.extract_strided_slice %46 {offsets = [0, 192], sizes = [8, 64], strides = [1, 1]} : vector<8x256xf32> to vector<8x64xf32>
    %55 = math.tanh %53 : vector<8x64xf32>
    %56 = arith.mulf %54, %55 : vector<8x64xf32>
    %c8 = arith.constant 8 : index
    %c0_20 = arith.constant 0 : index
    %57 = vector.load %arg11[%c8, %c0_20] : memref<64x64xf32, #tpu.memory_space<vmem>>, vector<8x64xf32>
    tpu.vector_store %arg11[%c8, %c0_20], %56 {strides = array<i32>} : memref<64x64xf32, #tpu.memory_space<vmem>>, vector<8x64xf32>,
    %58 = vector.extract_strided_slice %16 {offsets = [16, 0], sizes = [8, 256], strides = [1, 1]} : vector<64x256xf32> to vector<8x256xf32>
    %59 = arith.truncf %56 : vector<8x64xf32> to vector<8x64xbf16>
    %cst_21 = arith.constant dense<0.000000e+00> : vector<8x256xf32>
    %60 = tpu.matmul %59, %17, %cst_21 {dimension_numbers = #tpu.dot_dimension_numbers<[1], [0], [0], [1], [0, 0, 1, 1], [], []>} : vector<8x64xbf16>, vector<64x256xbf16>, vector<8x256xf32> -> vector<8x256xf32>
    %61 = arith.addf %58, %60 : vector<8x256xf32>
    %62 = arith.negf %61 : vector<8x256xf32>
    %63 = math.exp %62 : vector<8x256xf32>
    %cst_22 = arith.constant 1.000000e+00 : f32
    %64 = vector.broadcast %cst_22 : f32 to vector<8x256xf32>
    %65 = arith.addf %64, %63 : vector<8x256xf32>
    %66 = arith.divf %64, %65 : vector<8x256xf32>
    %67 = vector.extract_strided_slice %61 {offsets = [0, 128], sizes = [8, 64], strides = [1, 1]} : vector<8x256xf32> to vector<8x64xf32>
    %68 = math.tanh %67 : vector<8x64xf32>
    %69 = vector.extract_strided_slice %66 {offsets = [0, 64], sizes = [8, 64], strides = [1, 1]} : vector<8x256xf32> to vector<8x64xf32>
    %70 = arith.mulf %69, %53 : vector<8x64xf32>
    %71 = vector.extract_strided_slice %66 {offsets = [0, 0], sizes = [8, 64], strides = [1, 1]} : vector<8x256xf32> to vector<8x64xf32>
    %72 = arith.mulf %71, %68 : vector<8x64xf32>
    %73 = arith.addf %70, %72 : vector<8x64xf32>
    %74 = vector.extract_strided_slice %66 {offsets = [0, 192], sizes = [8, 64], strides = [1, 1]} : vector<8x256xf32> to vector<8x64xf32>
    %75 = math.tanh %73 : vector<8x64xf32>
    %76 = arith.mulf %74, %75 : vector<8x64xf32>
    %c16 = arith.constant 16 : index
    %c0_23 = arith.constant 0 : index
    %77 = vector.load %arg11[%c16, %c0_23] : memref<64x64xf32, #tpu.memory_space<vmem>>, vector<8x64xf32>
    tpu.vector_store %arg11[%c16, %c0_23], %76 {strides = array<i32>} : memref<64x64xf32, #tpu.memory_space<vmem>>, vector<8x64xf32>,
    %78 = vector.extract_strided_slice %16 {offsets = [24, 0], sizes = [8, 256], strides = [1, 1]} : vector<64x256xf32> to vector<8x256xf32>
    %79 = arith.truncf %76 : vector<8x64xf32> to vector<8x64xbf16>
    %cst_24 = arith.constant dense<0.000000e+00> : vector<8x256xf32>
    %80 = tpu.matmul %79, %17, %cst_24 {dimension_numbers = #tpu.dot_dimension_numbers<[1], [0], [0], [1], [0, 0, 1, 1], [], []>} : vector<8x64xbf16>, vector<64x256xbf16>, vector<8x256xf32> -> vector<8x256xf32>
    %81 = arith.addf %78, %80 : vector<8x256xf32>
    %82 = arith.negf %81 : vector<8x256xf32>
    %83 = math.exp %82 : vector<8x256xf32>
    %cst_25 = arith.constant 1.000000e+00 : f32
    %84 = vector.broadcast %cst_25 : f32 to vector<8x256xf32>
    %85 = arith.addf %84, %83 : vector<8x256xf32>
    %86 = arith.divf %84, %85 : vector<8x256xf32>
    %87 = vector.extract_strided_slice %81 {offsets = [0, 128], sizes = [8, 64], strides = [1, 1]} : vector<8x256xf32> to vector<8x64xf32>
    %88 = math.tanh %87 : vector<8x64xf32>
    %89 = vector.extract_strided_slice %86 {offsets = [0, 64], sizes = [8, 64], strides = [1, 1]} : vector<8x256xf32> to vector<8x64xf32>
    %90 = arith.mulf %89, %73 : vector<8x64xf32>
    %91 = vector.extract_strided_slice %86 {offsets = [0, 0], sizes = [8, 64], strides = [1, 1]} : vector<8x256xf32> to vector<8x64xf32>
    %92 = arith.mulf %91, %88 : vector<8x64xf32>
    %93 = arith.addf %90, %92 : vector<8x64xf32>
    %94 = vector.extract_strided_slice %86 {offsets = [0, 192], sizes = [8, 64], strides = [1, 1]} : vector<8x256xf32> to vector<8x64xf32>
    %95 = math.tanh %93 : vector<8x64xf32>
    %96 = arith.mulf %94, %95 : vector<8x64xf32>
    %c24 = arith.constant 24 : index
    %c0_26 = arith.constant 0 : index
    %97 = vector.load %arg11[%c24, %c0_26] : memref<64x64xf32, #tpu.memory_space<vmem>>, vector<8x64xf32>
    tpu.vector_store %arg11[%c24, %c0_26], %96 {strides = array<i32>} : memref<64x64xf32, #tpu.memory_space<vmem>>, vector<8x64xf32>,
    %98 = vector.extract_strided_slice %16 {offsets = [32, 0], sizes = [8, 256], strides = [1, 1]} : vector<64x256xf32> to vector<8x256xf32>
    %99 = arith.truncf %96 : vector<8x64xf32> to vector<8x64xbf16>
    %cst_27 = arith.constant dense<0.000000e+00> : vector<8x256xf32>
    %100 = tpu.matmul %99, %17, %cst_27 {dimension_numbers = #tpu.dot_dimension_numbers<[1], [0], [0], [1], [0, 0, 1, 1], [], []>} : vector<8x64xbf16>, vector<64x256xbf16>, vector<8x256xf32> -> vector<8x256xf32>
    %101 = arith.addf %98, %100 : vector<8x256xf32>
    %102 = arith.negf %101 : vector<8x256xf32>
    %103 = math.exp %102 : vector<8x256xf32>
    %cst_28 = arith.constant 1.000000e+00 : f32
    %104 = vector.broadcast %cst_28 : f32 to vector<8x256xf32>
    %105 = arith.addf %104, %103 : vector<8x256xf32>
    %106 = arith.divf %104, %105 : vector<8x256xf32>
    %107 = vector.extract_strided_slice %101 {offsets = [0, 128], sizes = [8, 64], strides = [1, 1]} : vector<8x256xf32> to vector<8x64xf32>
    %108 = math.tanh %107 : vector<8x64xf32>
    %109 = vector.extract_strided_slice %106 {offsets = [0, 64], sizes = [8, 64], strides = [1, 1]} : vector<8x256xf32> to vector<8x64xf32>
    %110 = arith.mulf %109, %93 : vector<8x64xf32>
    %111 = vector.extract_strided_slice %106 {offsets = [0, 0], sizes = [8, 64], strides = [1, 1]} : vector<8x256xf32> to vector<8x64xf32>
    %112 = arith.mulf %111, %108 : vector<8x64xf32>
    %113 = arith.addf %110, %112 : vector<8x64xf32>
    %114 = vector.extract_strided_slice %106 {offsets = [0, 192], sizes = [8, 64], strides = [1, 1]} : vector<8x256xf32> to vector<8x64xf32>
    %115 = math.tanh %113 : vector<8x64xf32>
    %116 = arith.mulf %114, %115 : vector<8x64xf32>
    %c32 = arith.constant 32 : index
    %c0_29 = arith.constant 0 : index
    %117 = vector.load %arg11[%c32, %c0_29] : memref<64x64xf32, #tpu.memory_space<vmem>>, vector<8x64xf32>
    tpu.vector_store %arg11[%c32, %c0_29], %116 {strides = array<i32>} : memref<64x64xf32, #tpu.memory_space<vmem>>, vector<8x64xf32>,
    %118 = vector.extract_strided_slice %16 {offsets = [40, 0], sizes = [8, 256], strides = [1, 1]} : vector<64x256xf32> to vector<8x256xf32>
    %119 = arith.truncf %116 : vector<8x64xf32> to vector<8x64xbf16>
    %cst_30 = arith.constant dense<0.000000e+00> : vector<8x256xf32>
    %120 = tpu.matmul %119, %17, %cst_30 {dimension_numbers = #tpu.dot_dimension_numbers<[1], [0], [0], [1], [0, 0, 1, 1], [], []>} : vector<8x64xbf16>, vector<64x256xbf16>, vector<8x256xf32> -> vector<8x256xf32>
    %121 = arith.addf %118, %120 : vector<8x256xf32>
    %122 = arith.negf %121 : vector<8x256xf32>
    %123 = math.exp %122 : vector<8x256xf32>
    %cst_31 = arith.constant 1.000000e+00 : f32
    %124 = vector.broadcast %cst_31 : f32 to vector<8x256xf32>
    %125 = arith.addf %124, %123 : vector<8x256xf32>
    %126 = arith.divf %124, %125 : vector<8x256xf32>
    %127 = vector.extract_strided_slice %121 {offsets = [0, 128], sizes = [8, 64], strides = [1, 1]} : vector<8x256xf32> to vector<8x64xf32>
    %128 = math.tanh %127 : vector<8x64xf32>
    %129 = vector.extract_strided_slice %126 {offsets = [0, 64], sizes = [8, 64], strides = [1, 1]} : vector<8x256xf32> to vector<8x64xf32>
    %130 = arith.mulf %129, %113 : vector<8x64xf32>
    %131 = vector.extract_strided_slice %126 {offsets = [0, 0], sizes = [8, 64], strides = [1, 1]} : vector<8x256xf32> to vector<8x64xf32>
    %132 = arith.mulf %131, %128 : vector<8x64xf32>
    %133 = arith.addf %130, %132 : vector<8x64xf32>
    %134 = vector.extract_strided_slice %126 {offsets = [0, 192], sizes = [8, 64], strides = [1, 1]} : vector<8x256xf32> to vector<8x64xf32>
    %135 = math.tanh %133 : vector<8x64xf32>
    %136 = arith.mulf %134, %135 : vector<8x64xf32>
    %c40 = arith.constant 40 : index
    %c0_32 = arith.constant 0 : index
    %137 = vector.load %arg11[%c40, %c0_32] : memref<64x64xf32, #tpu.memory_space<vmem>>, vector<8x64xf32>
    tpu.vector_store %arg11[%c40, %c0_32], %136 {strides = array<i32>} : memref<64x64xf32, #tpu.memory_space<vmem>>, vector<8x64xf32>,
    %138 = vector.extract_strided_slice %16 {offsets = [48, 0], sizes = [8, 256], strides = [1, 1]} : vector<64x256xf32> to vector<8x256xf32>
    %139 = arith.truncf %136 : vector<8x64xf32> to vector<8x64xbf16>
    %cst_33 = arith.constant dense<0.000000e+00> : vector<8x256xf32>
    %140 = tpu.matmul %139, %17, %cst_33 {dimension_numbers = #tpu.dot_dimension_numbers<[1], [0], [0], [1], [0, 0, 1, 1], [], []>} : vector<8x64xbf16>, vector<64x256xbf16>, vector<8x256xf32> -> vector<8x256xf32>
    %141 = arith.addf %138, %140 : vector<8x256xf32>
    %142 = arith.negf %141 : vector<8x256xf32>
    %143 = math.exp %142 : vector<8x256xf32>
    %cst_34 = arith.constant 1.000000e+00 : f32
    %144 = vector.broadcast %cst_34 : f32 to vector<8x256xf32>
    %145 = arith.addf %144, %143 : vector<8x256xf32>
    %146 = arith.divf %144, %145 : vector<8x256xf32>
    %147 = vector.extract_strided_slice %141 {offsets = [0, 128], sizes = [8, 64], strides = [1, 1]} : vector<8x256xf32> to vector<8x64xf32>
    %148 = math.tanh %147 : vector<8x64xf32>
    %149 = vector.extract_strided_slice %146 {offsets = [0, 64], sizes = [8, 64], strides = [1, 1]} : vector<8x256xf32> to vector<8x64xf32>
    %150 = arith.mulf %149, %133 : vector<8x64xf32>
    %151 = vector.extract_strided_slice %146 {offsets = [0, 0], sizes = [8, 64], strides = [1, 1]} : vector<8x256xf32> to vector<8x64xf32>
    %152 = arith.mulf %151, %148 : vector<8x64xf32>
    %153 = arith.addf %150, %152 : vector<8x64xf32>
    %154 = vector.extract_strided_slice %146 {offsets = [0, 192], sizes = [8, 64], strides = [1, 1]} : vector<8x256xf32> to vector<8x64xf32>
    %155 = math.tanh %153 : vector<8x64xf32>
    %156 = arith.mulf %154, %155 : vector<8x64xf32>
    %c48 = arith.constant 48 : index
    %c0_35 = arith.constant 0 : index
    %157 = vector.load %arg11[%c48, %c0_35] : memref<64x64xf32, #tpu.memory_space<vmem>>, vector<8x64xf32>
    tpu.vector_store %arg11[%c48, %c0_35], %156 {strides = array<i32>} : memref<64x64xf32, #tpu.memory_space<vmem>>, vector<8x64xf32>,
    %158 = vector.extract_strided_slice %16 {offsets = [56, 0], sizes = [8, 256], strides = [1, 1]} : vector<64x256xf32> to vector<8x256xf32>
    %159 = arith.truncf %156 : vector<8x64xf32> to vector<8x64xbf16>
    %cst_36 = arith.constant dense<0.000000e+00> : vector<8x256xf32>
    %160 = tpu.matmul %159, %17, %cst_36 {dimension_numbers = #tpu.dot_dimension_numbers<[1], [0], [0], [1], [0, 0, 1, 1], [], []>} : vector<8x64xbf16>, vector<64x256xbf16>, vector<8x256xf32> -> vector<8x256xf32>
    %161 = arith.addf %158, %160 : vector<8x256xf32>
    %162 = arith.negf %161 : vector<8x256xf32>
    %163 = math.exp %162 : vector<8x256xf32>
    %cst_37 = arith.constant 1.000000e+00 : f32
    %164 = vector.broadcast %cst_37 : f32 to vector<8x256xf32>
    %165 = arith.addf %164, %163 : vector<8x256xf32>
    %166 = arith.divf %164, %165 : vector<8x256xf32>
    %167 = vector.extract_strided_slice %161 {offsets = [0, 128], sizes = [8, 64], strides = [1, 1]} : vector<8x256xf32> to vector<8x64xf32>
    %168 = math.tanh %167 : vector<8x64xf32>
    %169 = vector.extract_strided_slice %166 {offsets = [0, 64], sizes = [8, 64], strides = [1, 1]} : vector<8x256xf32> to vector<8x64xf32>
    %170 = arith.mulf %169, %153 : vector<8x64xf32>
    %171 = vector.extract_strided_slice %166 {offsets = [0, 0], sizes = [8, 64], strides = [1, 1]} : vector<8x256xf32> to vector<8x64xf32>
    %172 = arith.mulf %171, %168 : vector<8x64xf32>
    %173 = arith.addf %170, %172 : vector<8x64xf32>
    %174 = vector.extract_strided_slice %166 {offsets = [0, 192], sizes = [8, 64], strides = [1, 1]} : vector<8x256xf32> to vector<8x64xf32>
    %175 = math.tanh %173 : vector<8x64xf32>
    %176 = arith.mulf %174, %175 : vector<8x64xf32>
    %c56 = arith.constant 56 : index
    %c0_38 = arith.constant 0 : index
    %177 = vector.load %arg11[%c56, %c0_38] : memref<64x64xf32, #tpu.memory_space<vmem>>, vector<8x64xf32>
    tpu.vector_store %arg11[%c56, %c0_38], %176 {strides = array<i32>} : memref<64x64xf32, #tpu.memory_space<vmem>>, vector<8x64xf32>,
    %178 = tpu.concatenate %176, %173 in 1 : vector<8x64xf32>, vector<8x64xf32> -> vector<8x128xf32>
    %c0_39 = arith.constant 0 : index
    %c0_40 = arith.constant 0 : index
    %179 = vector.load %arg10[%c0_39, %c0_40] : memref<8x128xf32, #tpu.memory_space<vmem>>, vector<8x128xf32>
    tpu.vector_store %arg10[%c0_39, %c0_40], %178 {strides = array<i32>} : memref<8x128xf32, #tpu.memory_space<vmem>>, vector<8x128xf32>,
    %c0_41 = arith.constant 0 : index
    %c0_42 = arith.constant 0 : index
    %180 = vector.load %arg11[%c0_41, %c0_42] : memref<64x64xf32, #tpu.memory_space<vmem>>, vector<64x64xf32>
    %181 = arith.truncf %180 : vector<64x64xf32> to vector<64x64xbf16>
    %c0_43 = arith.constant 0 : index
    %c0_44 = arith.constant 0 : index
    %182 = vector.load %arg7[%c0_43, %c0_44] : memref<64x128xbf16, #tpu.memory_space<vmem>>, vector<64x128xbf16>
    %cst_45 = arith.constant dense<0.000000e+00> : vector<64x128xf32>
    %183 = tpu.matmul %181, %182, %cst_45 {dimension_numbers = #tpu.dot_dimension_numbers<[1], [0], [0], [1], [0, 0, 1, 1], [], []>} : vector<64x64xbf16>, vector<64x128xbf16>, vector<64x128xf32> -> vector<64x128xf32>
    %c0_46 = arith.constant 0 : index
    %c0_47 = arith.constant 0 : index
    %184 = vector.load %arg8[%c0_46, %c0_47] : memref<1x128xf32, #tpu.memory_space<vmem>>, vector<1x128xf32>
    %185 = vector.broadcast %184 : vector<1x128xf32> to vector<64x128xf32>
    %186 = arith.addf %183, %185 : vector<64x128xf32>
    %187 = tpu.iota {dimensions = array<i32: 1>} : vector<64x128xi32>
    %c20_i32 = arith.constant 20 : i32
    %188 = vector.broadcast %c20_i32 : i32 to vector<64x128xi32>
    %189 = arith.cmpi slt, %187, %188 : vector<64x128xi32>
    %c60_i32 = arith.constant 60 : i32
    %190 = vector.broadcast %c60_i32 : i32 to vector<64x128xi32>
    %191 = arith.cmpi sge, %187, %190 : vector<64x128xi32>
    %c100_i32 = arith.constant 100 : i32
    %192 = vector.broadcast %c100_i32 : i32 to vector<64x128xi32>
    %193 = arith.cmpi slt, %187, %192 : vector<64x128xi32>
    %194 = arith.andi %191, %193 : vector<64x128xi1>
    %c100_i32_48 = arith.constant 100 : i32
    %195 = vector.broadcast %c100_i32_48 : i32 to vector<64x128xi32>
    %196 = arith.cmpi sge, %187, %195 : vector<64x128xi32>
    %c120_i32 = arith.constant 120 : i32
    %197 = vector.broadcast %c120_i32 : i32 to vector<64x128xi32>
    %198 = arith.cmpi slt, %187, %197 : vector<64x128xi32>
    %199 = arith.andi %196, %198 : vector<64x128xi1>
    %c120_i32_49 = arith.constant 120 : i32
    %200 = vector.broadcast %c120_i32_49 : i32 to vector<64x128xi32>
    %201 = arith.cmpi sge, %187, %200 : vector<64x128xi32>
    %c123_i32 = arith.constant 123 : i32
    %202 = vector.broadcast %c123_i32 : i32 to vector<64x128xi32>
    %203 = arith.cmpi slt, %187, %202 : vector<64x128xi32>
    %204 = arith.andi %201, %203 : vector<64x128xi1>
    %cst_50 = arith.constant -1.000000e+30 : f32
    %205 = vector.broadcast %cst_50 : f32 to vector<64x128xf32>
    %206 = arith.select %189, %186, %205 : vector<64x128xi1>, vector<64x128xf32>
    %cst_51 = arith.constant dense<0xFF800000> : vector<64xf32>
    %207 = vector.multi_reduction <maximumf>, %206, %cst_51 [1] : vector<64x128xf32> to vector<64xf32>
    %208 = vector.shape_cast %207 : vector<64xf32> to vector<64x1xf32>
    %cst_52 = arith.constant -1.000000e+30 : f32
    %209 = vector.broadcast %cst_52 : f32 to vector<64x128xf32>
    %210 = arith.select %204, %186, %209 : vector<64x128xi1>, vector<64x128xf32>
    %cst_53 = arith.constant dense<0xFF800000> : vector<64xf32>
    %211 = vector.multi_reduction <maximumf>, %210, %cst_53 [1] : vector<64x128xf32> to vector<64xf32>
    %212 = vector.shape_cast %211 : vector<64xf32> to vector<64x1xf32>
    %cst_54 = arith.constant 0.000000e+00 : f32
    %213 = vector.shape_cast %212 : vector<64x1xf32> to vector<64x1xf32>
    %214 = vector.broadcast %213 : vector<64x1xf32> to vector<64x128xf32>
    %215 = vector.broadcast %cst_54 : f32 to vector<64x128xf32>
    %216 = arith.select %204, %214, %215 : vector<64x128xi1>, vector<64x128xf32>
    %217 = vector.shape_cast %208 : vector<64x1xf32> to vector<64x1xf32>
    %218 = vector.broadcast %217 : vector<64x1xf32> to vector<64x128xf32>
    %219 = arith.select %189, %218, %216 : vector<64x128xi1>, vector<64x128xf32>
    %220 = arith.subf %186, %219 : vector<64x128xf32>
    %221 = math.exp %220 : vector<64x128xf32>
    %222 = math.tanh %186 : vector<64x128xf32>
    %cst_55 = arith.constant 0.000000e+00 : f32
    %223 = vector.broadcast %cst_55 : f32 to vector<64x128xf32>
    %224 = arith.select %189, %221, %223 : vector<64x128xi1>, vector<64x128xf32>
    %cst_56 = arith.constant dense<0.000000e+00> : vector<64xf32>
    %225 = vector.multi_reduction <add>, %224, %cst_56 [1] : vector<64x128xf32> to vector<64xf32>
    %226 = vector.shape_cast %225 : vector<64xf32> to vector<64x1xf32>
    %cst_57 = arith.constant 0.000000e+00 : f32
    %227 = vector.broadcast %cst_57 : f32 to vector<64x128xf32>
    %228 = arith.select %204, %221, %227 : vector<64x128xi1>, vector<64x128xf32>
    %cst_58 = arith.constant dense<0.000000e+00> : vector<64xf32>
    %229 = vector.multi_reduction <add>, %228, %cst_58 [1] : vector<64x128xf32> to vector<64xf32>
    %230 = vector.shape_cast %229 : vector<64xf32> to vector<64x1xf32>
    %231 = tpu.reciprocal %226 {approx = true} : vector<64x1xf32> -> vector<64x1xf32>
    %232 = arith.mulf %226, %231 : vector<64x1xf32>
    %cst_59 = arith.constant 2.000000e+00 : f32
    %233 = vector.broadcast %cst_59 : f32 to vector<64x1xf32>
    %234 = arith.subf %233, %232 : vector<64x1xf32>
    %235 = arith.mulf %231, %234 : vector<64x1xf32>
    %236 = tpu.reciprocal %230 {approx = true} : vector<64x1xf32> -> vector<64x1xf32>
    %237 = arith.mulf %230, %236 : vector<64x1xf32>
    %cst_60 = arith.constant 2.000000e+00 : f32
    %238 = vector.broadcast %cst_60 : f32 to vector<64x1xf32>
    %239 = arith.subf %238, %237 : vector<64x1xf32>
    %240 = arith.mulf %236, %239 : vector<64x1xf32>
    %241 = arith.select %194, %221, %186 : vector<64x128xi1>, vector<64x128xf32>
    %242 = arith.select %199, %222, %241 : vector<64x128xi1>, vector<64x128xf32>
    %243 = vector.broadcast %235 : vector<64x1xf32> to vector<64x128xf32>
    %244 = arith.mulf %221, %243 : vector<64x128xf32>
    %245 = arith.select %189, %244, %242 : vector<64x128xi1>, vector<64x128xf32>
    %246 = vector.broadcast %240 : vector<64x1xf32> to vector<64x128xf32>
    %247 = arith.mulf %221, %246 : vector<64x128xf32>
    %248 = arith.select %204, %247, %245 : vector<64x128xi1>, vector<64x128xf32>
    %c123_i32_61 = arith.constant 123 : i32
    %249 = vector.broadcast %c123_i32_61 : i32 to vector<64x128xi32>
    %250 = arith.cmpi slt, %187, %249 : vector<64x128xi32>
    %cst_62 = arith.constant 0.000000e+00 : f32
    %251 = vector.broadcast %cst_62 : f32 to vector<64x128xf32>
    %252 = arith.select %250, %248, %251 : vector<64x128xi1>, vector<64x128xf32>
    %c0_63 = arith.constant 0 : index
    %c0_64 = arith.constant 0 : index
    %253 = vector.load %arg9[%c0_63, %c0_64] : memref<64x128xf32, #tpu.memory_space<vmem>>, vector<64x128xf32>
    tpu.vector_store %arg9[%c0_63, %c0_64], %252 {strides = array<i32>} : memref<64x128xf32, #tpu.memory_space<vmem>>, vector<64x128xf32>,
    return
  }
}

</mosaic_0001>

<llo_original>
// kernel: decoder_forward.1
$region0: #{decoder_forward.1}
  #allocation0 [shape = 'u32[]', space=smem, size = 0x4, offset = 0x4, fixed_abs, tag = 'smem constant byte address 0x4 - core index']
  #allocation1 [shape = 'u32[144,128]{1,0:T(1,128)}', space=vmem, size = 0x12000, scoped, tag = 'internal scratch']
  #allocation2 [shape = 'f32[64,64]{1,0:T(8,128)}', space=vmem, size = 0x8000, scoped, tag = 'scratch operand']
  %s0 = inlined_call_operand.vmem [shape: f32[64,64], index: 0, kind: input, shape index: {}]
  %s1 = inlined_call_operand.vmem [shape: f32[8,32], index: 1, kind: input, shape index: {}]
  %s2 = inlined_call_operand.hbm [shape: bf16[32,128], index: 2, kind: input, shape index: {}]
  %s3 = inlined_call_operand.hbm [shape: f32[1,128], index: 3, kind: input, shape index: {}]
  %s4 = inlined_call_operand.vmem [shape: bf16[64,256], index: 4, kind: input, shape index: {}]
  %s5 = inlined_call_operand.vmem [shape: f32[1,256], index: 5, kind: input, shape index: {}]
  %s6 = inlined_call_operand.hbm [shape: bf16[64,256], index: 6, kind: input, shape index: {}]
  %s7 = inlined_call_operand.vmem [shape: bf16[64,128], index: 7, kind: input, shape index: {}]
  %s8 = inlined_call_operand.vmem [shape: f32[1,128], index: 8, kind: input, shape index: {}]
  %s9 = inlined_call_operand.vmem [shape: f32[64,128], index: 9, kind: output, shape index: {0}]
  %s10 = inlined_call_operand.vmem [shape: f32[8,128], index: 10, kind: output, shape index: {1}]
  %11 = xla_tuple %s9, %s10
  %s12 = sld [smem:[#allocation0]]
  $region66: #{decoder_forward.1} parent=0
    _
  %s14 = ssub.s32 1, %s12
  %s15 = scalar_select 0, %s14, %s12
  $region1: #{decoder_forward.1} parent=0
    #allocation3 [shape = 'u8[8192]{0}', space=vmem, size = 0x2000, scoped, tag = 'input window, operand 2, single buffered']
    #allocation4 [shape = 's32[1]{0}', space=sflag, size = 0x4, scoped, tag = 'scoped memory for decoder_forward.1']
    #allocation5 [shape = 'u8[512]{0}', space=vmem, size = 0x400, scoped, tag = 'input window, operand 3, single buffered']
    #allocation6 [shape = 's32[1]{0}', space=sflag, size = 0x4, scoped, tag = 'scoped memory for decoder_forward.1']
    #allocation7 [shape = 'u8[32768]{0}', space=vmem, size = 0x8000, scoped, tag = 'input window, operand 6, single buffered']
    %16 = vsyncpa [#allocation4], 0
    %17 = vsyncpa [#allocation6], 0
    // Predicated region
    $region2: #{decoder_forward.1} parent=1 // pred_check
      _
    $region3: #{decoder_forward.1} parent=1 // pred_check_branch
      %19 = sbr.rel (0) target = $region5
    $region4: #{decoder_forward.1} parent=1 // pred_region
      _
    $region5: #{decoder_forward.1} parent=1 // pred_fallthru
      _
    // Predicated region
    $region6: #{decoder_forward.1} parent=1 // pred_check
      _
    $region7: #{decoder_forward.1} parent=1 // pred_check_branch
      %21 = sbr.rel (0) target = $region9
    $region8: #{decoder_forward.1} parent=1 // pred_region
      _
    $region9: #{decoder_forward.1} parent=1 // pred_fallthru
      _
    // Predicated region
    $region10: #{decoder_forward.1} parent=1 // pred_check
      _
    $region11: #{decoder_forward.1} parent=1 // pred_check_branch
      %23 = sbr.rel (0) target = $region13
    $region12: #{decoder_forward.1} parent=1 // pred_region
      %s25 = ssub.s32 256, 256
      %26 = vsyncadd [#allocation4], %s25
      %s27 = sshll.u32 [#allocation3], 4
      %s28 = int_to_ptr.vmem [resolvable:$true] %s27
      %33 = dma.hbm_to_vmem [thread:$0]  %s2, 256, %s28, [#allocation4], 64, 64, 4
    $region13: #{decoder_forward.1} parent=1 // pred_fallthru
      _
    // Predicated region
    $region14: #{decoder_forward.1} parent=1 // pred_check
      _
    $region15: #{decoder_forward.1} parent=1 // pred_check_branch
      %35 = sbr.rel (0) target = $region17
    $region16: #{decoder_forward.1} parent=1 // pred_region
      %s37 = ssub.s32 16, 16
      %38 = vsyncadd [#allocation6], %s37
      %s40 = sshll.u32 [#allocation5], 4
      %s41 = int_to_ptr.vmem [resolvable:$true] %s40
      %43 = dma.hbm_to_vmem [thread:$0]  %s3, 16, %s41, [#allocation6]
    $region17: #{decoder_forward.1} parent=1 // pred_fallthru
      _
    // Predicated region
    $region18: #{decoder_forward.1} parent=1 // pred_check
      _
    $region19: #{decoder_forward.1} parent=1 // pred_check_branch
      %45 = sbr.rel (0) target = $region21
    $region20: #{decoder_forward.1} parent=1 // pred_region
      _
    $region21: #{decoder_forward.1} parent=1 // pred_fallthru
      _
    // Predicated region
    $region22: #{decoder_forward.1} parent=1 // pred_check
      _
    $region23: #{decoder_forward.1} parent=1 // pred_check_branch
      %47 = sbr.rel (0) target = $region25
    $region24: #{decoder_forward.1} parent=1 // pred_region
      _
    $region25: #{decoder_forward.1} parent=1 // pred_fallthru
      _
    // Predicated region
    $region26: #{decoder_forward.1} parent=1 // pred_check
      _
    $region27: #{decoder_forward.1} parent=1 // pred_check_branch
      %49 = sbr.rel (0) target = $region29
    $region28: #{decoder_forward.1} parent=1 // pred_region
      %s51 = ssub.s32 1024, 1024
      %52 = vsyncadd [#allocation6], %s51
      %s53 = sshll.u32 [#allocation7], 4
      %s54 = int_to_ptr.vmem [resolvable:$true] %s53
      %59 = dma.hbm_to_vmem [thread:$0]  %s6, 1024, %s54, [#allocation6], 128, 128, 8
    $region29: #{decoder_forward.1} parent=1 // pred_fallthru
      _
    // Predicated region
    $region30: #{decoder_forward.1} parent=1 // pred_check
      _
    $region31: #{decoder_forward.1} parent=1 // pred_check_branch
      %61 = sbr.rel (0) target = $region33
    $region32: #{decoder_forward.1} parent=1 // pred_region
      _
    $region33: #{decoder_forward.1} parent=1 // pred_fallthru
      _
    // Predicated region
    $region34: #{decoder_forward.1} parent=1 // pred_check
      _
    $region35: #{decoder_forward.1} parent=1 // pred_check_branch
      %63 = sbr.rel (0) target = $region37
    $region36: #{decoder_forward.1} parent=1 // pred_region
      _
    $region37: #{decoder_forward.1} parent=1 // pred_fallthru
      _
    // Predicated region
    $region38: #{decoder_forward.1} parent=1 // pred_check
      _
    $region39: #{decoder_forward.1} parent=1 // pred_check_branch
      %65 = sbr.rel (0) target = $region41
    $region40: #{decoder_forward.1} parent=1 // pred_region
      %66 = dma.done [#allocation4], 256
    $region41: #{decoder_forward.1} parent=1 // pred_fallthru
      _
    // Predicated region
    $region42: #{decoder_forward.1} parent=1 // pred_check
      _
    $region43: #{decoder_forward.1} parent=1 // pred_check_branch
      %68 = sbr.rel (0) target = $region45
    $region44: #{decoder_forward.1} parent=1 // pred_region
      %69 = dma.done [#allocation6], 16
    $region45: #{decoder_forward.1} parent=1 // pred_fallthru
      _
    // Predicated region
    $region46: #{decoder_forward.1} parent=1 // pred_check
      _
    $region47: #{decoder_forward.1} parent=1 // pred_check_branch
      %71 = sbr.rel (0) target = $region49
    $region48: #{decoder_forward.1} parent=1 // pred_region
      %72 = dma.done [#allocation6], 1024
    $region49: #{decoder_forward.1} parent=1 // pred_fallthru
      _
    %v74 = vld [vmem:[%s1] sm:$0xff]
    %v75 = vpack.c.bf16 %v74, %v74
    %v76 = vld [vmem:[#allocation3] sm:$0xf]
    %v77 = vld [vmem:[#allocation3 + $0x4] sm:$0xf]
    %v78 = vld [vmem:[#allocation3 + $0x8] sm:$0xf]
    %v79 = vld [vmem:[#allocation3 + $0xc] sm:$0xf]
    %v80 = vld [vmem:[#allocation5] sm:$0x1]
    %v82 = vlaneseq
    %v83 = vshrl.u32 %v82, 7
    %v84 = vsub.s32 0, %v83
    %v85 = vrot.slane %v80, %v84
    %v91 = vunpack.c.l.b16 %v76
    %v92 = vunpack.c.l.b16 %v77
    %v93 = vunpack.c.l.b16 %v78
    %v94 = vunpack.c.l.b16 %v79
    %v95 = vpack.c.b16 %v92, %v91
    %v96 = vpack.c.b16 %v94, %v93
    %vm99 = vcmask 261120
    %v101 = vsel %vm99, %v75, 0
    %103 = vmatprep.subr.bf16.mxu0 0
    %104 = vmatpush1.bf16.msra.mxu0 0
    %105 = vmatprep.subr.bf16.mxu0 0
    %106 = vmatpush1.bf16.msra.mxu0 0
    %107 = vmatprep.subr.bf16.mxu0 0
    %108 = vmatpush1.bf16.msra.mxu0 0
    %109 = vmatprep.subr.bf16.mxu0 0
    %110 = vmatpush1.bf16.msra.mxu0 0
    %111 = vmatprep.subr.bf16.mxu0 0
    %112 = vmatpush1.bf16.msra.mxu0 0
    %113 = vmatprep.subr.bf16.mxu0 0
    %114 = vmatpush1.bf16.msra.mxu0 0
    %115 = vmatprep.subr.bf16.mxu0 0
    %116 = vmatpush1.bf16.msra.mxu0 %v96
    %117 = vmatprep.subr.bf16.mxu0 0
    %118 = vmatpush1.bf16.msra.mxu0 %v95
    %119 = vmatprep.subr.bf16.mxu0 0
    %120 = vmatpush2.bf16.msra.mxu0 0
    %121 = vmatprep.subr.bf16.mxu0 0
    %122 = vmatpush2.bf16.msra.mxu0 0
    %123 = vmatprep.subr.bf16.mxu0 0
    %124 = vmatpush2.bf16.msra.mxu0 0
    %125 = vmatprep.subr.bf16.mxu0 0
    %126 = vmatpush2.bf16.msra.mxu0 0
    %127 = vmatprep.subr.bf16.mxu0 0
    %128 = vmatpush2.bf16.msra.mxu0 0
    %129 = vmatprep.subr.bf16.mxu0 0
    %130 = vmatpush2.bf16.msra.mxu0 0
    %131 = vmatprep.subr.bf16.mxu0 0
    %132 = vmatpush2.bf16.msra.mxu0 0
    %133 = vmatprep.subr.bf16.mxu0 0
    %134 = vmatpush2.bf16.msra.mxu0 0
    %135 = vmatprep.mubr.bf16.mxu0 0
    %136 = vmatmul.mubr.bf16.gmra.mxu0 %v101
    %v137 = vpop.f32.mrf.mxu0
    %v138 = vadd.f32 %v85, %v137
    %v139 = vpop.f32.mrf.mxu0
    %v140 = vpop.f32.mrf.mxu0
    %v141 = vpop.f32.mrf.mxu0
    %142 = vdwg.mxu0
    %v143 = vtanh.pop %v138
    %v144 = vld [vmem:[%s0] sm:$0xff]
    %v145 = vld [vmem:[%s0 + $0x8] sm:$0xff]
    %v146 = vld [vmem:[%s0 + $0x10] sm:$0xff]
    %v147 = vld [vmem:[%s0 + $0x18] sm:$0xff]
    %v148 = vld [vmem:[%s0 + $0x20] sm:$0xff]
    %v149 = vld [vmem:[%s0 + $0x28] sm:$0xff]
    %v150 = vld [vmem:[%s0 + $0x30] sm:$0xff]
    %v151 = vld [vmem:[%s0 + $0x38] sm:$0xff]
    %v152 = vpack.c.bf16 %v145, %v144
    %v153 = vpack.c.bf16 %v147, %v146
    %v154 = vpack.c.bf16 %v149, %v148
    %v155 = vpack.c.bf16 %v151, %v150
    %v156 = vld [vmem:[%s4] sm:$0xff]
    %v157 = vld [vmem:[%s4 + $0x8] sm:$0xff]
    %v158 = vld [vmem:[%s4 + $0x10] sm:$0xff]
    %v159 = vld [vmem:[%s4 + $0x18] sm:$0xff]
    %v160 = vld [vmem:[%s4 + $0x20] sm:$0xff]
    %v161 = vld [vmem:[%s4 + $0x28] sm:$0xff]
    %v162 = vld [vmem:[%s4 + $0x30] sm:$0xff]
    %v163 = vld [vmem:[%s4 + $0x38] sm:$0xff]
    %v164 = vld [vmem:[%s5] sm:$0x3]
    %v166 = vlaneseq
    %v167 = vshrl.u32 %v166, 7
    %v168 = vsub.s32 0, %v167
    %v169 = vrot.slane %v164, %v168
    %v170 = vlaneseq
    %v171 = vshrl.u32 %v170, 7
    %v172 = vsub.s32 1, %v171
    %v173 = vrot.slane %v164, %v172
    %v184 = vunpack.c.l.b16 %v156
    %v185 = vunpack.c.h.b16 %v156
    %v186 = vunpack.c.l.b16 %v157
    %v187 = vunpack.c.h.b16 %v157
    %v188 = vunpack.c.l.b16 %v158
    %v189 = vunpack.c.h.b16 %v158
    %v190 = vunpack.c.l.b16 %v159
    %v191 = vunpack.c.h.b16 %v159
    %v192 = vunpack.c.l.b16 %v160
    %v193 = vunpack.c.h.b16 %v160
    %v194 = vunpack.c.l.b16 %v161
    %v195 = vunpack.c.h.b16 %v161
    %v196 = vunpack.c.l.b16 %v162
    %v197 = vunpack.c.h.b16 %v162
    %v198 = vunpack.c.l.b16 %v163
    %v199 = vunpack.c.h.b16 %v163
    %v200 = vpack.c.b16 %v186, %v184
    %v201 = vpack.c.b16 %v187, %v185
    %v202 = vpack.c.b16 %v190, %v188
    %v203 = vpack.c.b16 %v191, %v189
    %v204 = vpack.c.b16 %v194, %v192
    %v205 = vpack.c.b16 %v195, %v193
    %v206 = vpack.c.b16 %v198, %v196
    %v207 = vpack.c.b16 %v199, %v197
    %vm216 = vcmask 523264
    %v218 = vsel %vm216, %v152, 0
    %v221 = vsel %vm216, %v153, 0
    %v224 = vsel %vm216, %v154, 0
    %v227 = vsel %vm216, %v155, 0
    %229 = vmatprep.subr.bf16.mxu0 0
    %230 = vmatpush1.bf16.msra.mxu0 0
    %231 = vmatprep.subr.bf16.mxu0 0
    %232 = vmatpush1.bf16.msra.mxu0 0
    %233 = vmatprep.subr.bf16.mxu0 0
    %234 = vmatpush1.bf16.msra.mxu0 0
    %235 = vmatprep.subr.bf16.mxu0 0
    %236 = vmatpush1.bf16.msra.mxu0 0
    %237 = vmatprep.subr.bf16.mxu0 %v207
    %238 = vmatpush1.bf16.msra.mxu0 %v206
    %239 = vmatprep.subr.bf16.mxu0 %v205
    %240 = vmatpush1.bf16.msra.mxu0 %v204
    %241 = vmatprep.subr.bf16.mxu0 %v203
    %242 = vmatpush1.bf16.msra.mxu0 %v202
    %243 = vmatprep.subr.bf16.mxu0 %v201
    %244 = vmatpush1.bf16.msra.mxu0 %v200
    %245 = vmatprep.subr.bf16.mxu0 0
    %246 = vmatpush2.bf16.msra.mxu0 0
    %247 = vmatprep.subr.bf16.mxu0 0
    %248 = vmatpush2.bf16.msra.mxu0 0
    %249 = vmatprep.subr.bf16.mxu0 0
    %250 = vmatpush2.bf16.msra.mxu0 0
    %251 = vmatprep.subr.bf16.mxu0 0
    %252 = vmatpush2.bf16.msra.mxu0 0
    %253 = vmatprep.subr.bf16.mxu0 0
    %254 = vmatpush2.bf16.msra.mxu0 0
    %255 = vmatprep.subr.bf16.mxu0 0
    %256 = vmatpush2.bf16.msra.mxu0 0
    %257 = vmatprep.subr.bf16.mxu0 0
    %258 = vmatpush2.bf16.msra.mxu0 0
    %259 = vmatprep.subr.bf16.mxu0 0
    %260 = vmatpush2.bf16.msra.mxu0 0
    %261 = vmatprep.mubr.bf16.mxu0 0
    %262 = vmatmul.mubr.bf16.gmra.mxu0 %v218
    %v263 = vpop.f32.mrf.mxu0
    %v264 = vadd.f32 %v169, %v263
    %v265 = vpop.f32.mrf.mxu0
    %v266 = vadd.f32 %v173, %v265
    %v267 = vpop.f32.mrf.mxu0
    %v268 = vadd.f32 %v169, %v267
    %v269 = vpop.f32.mrf.mxu0
    %v270 = vadd.f32 %v173, %v269
    %271 = vmatprep.mubr.bf16.mxu0 0
    %272 = vmatmul.mubr.bf16.gmra.mxu0 %v221
    %v273 = vpop.f32.mrf.mxu0
    %v274 = vadd.f32 %v169, %v273
    %v275 = vpop.f32.mrf.mxu0
    %v276 = vadd.f32 %v173, %v275
    %v277 = vpop.f32.mrf.mxu0
    %v278 = vadd.f32 %v169, %v277
    %v279 = vpop.f32.mrf.mxu0
    %v280 = vadd.f32 %v173, %v279
    %281 = vmatprep.mubr.bf16.mxu0 0
    %282 = vmatmul.mubr.bf16.gmra.mxu0 %v224
    %v283 = vpop.f32.mrf.mxu0
    %v284 = vadd.f32 %v169, %v283
    %v285 = vpop.f32.mrf.mxu0
    %v286 = vadd.f32 %v173, %v285
    %v287 = vpop.f32.mrf.mxu0
    %v288 = vadd.f32 %v169, %v287
    %v289 = vpop.f32.mrf.mxu0
    %v290 = vadd.f32 %v173, %v289
    %291 = vmatprep.mubr.bf16.mxu0 0
    %292 = vmatmul.mubr.bf16.gmra.mxu0 %v227
    %v293 = vpop.f32.mrf.mxu0
    %v294 = vadd.f32 %v169, %v293
    %v295 = vpop.f32.mrf.mxu0
    %v296 = vadd.f32 %v173, %v295
    %v297 = vpop.f32.mrf.mxu0
    %v298 = vadd.f32 %v169, %v297
    %v299 = vpop.f32.mrf.mxu0
    %v300 = vadd.f32 %v173, %v299
    %301 = vdwg.mxu0
    %v302 = vld [vmem:[#allocation7] sm:$0xff]
    %v303 = vld [vmem:[#allocation7 + $0x8] sm:$0xff]
    %v304 = vld [vmem:[#allocation7 + $0x10] sm:$0xff]
    %v305 = vld [vmem:[#allocation7 + $0x18] sm:$0xff]
    %v306 = vld [vmem:[#allocation7 + $0x20] sm:$0xff]
    %v307 = vld [vmem:[#allocation7 + $0x28] sm:$0xff]
    %v308 = vld [vmem:[#allocation7 + $0x30] sm:$0xff]
    %v309 = vld [vmem:[#allocation7 + $0x38] sm:$0xff]
    %v310 = vpack.c.bf16 %v143, %v143
    %v319 = vunpack.c.l.b16 %v302
    %v320 = vunpack.c.h.b16 %v302
    %v321 = vunpack.c.l.b16 %v303
    %v322 = vunpack.c.h.b16 %v303
    %v323 = vunpack.c.l.b16 %v304
    %v324 = vunpack.c.h.b16 %v304
    %v325 = vunpack.c.l.b16 %v305
    %v326 = vunpack.c.h.b16 %v305
    %v327 = vunpack.c.l.b16 %v306
    %v328 = vunpack.c.h.b16 %v306
    %v329 = vunpack.c.l.b16 %v307
    %v330 = vunpack.c.h.b16 %v307
    %v331 = vunpack.c.l.b16 %v308
    %v332 = vunpack.c.h.b16 %v308
    %v333 = vunpack.c.l.b16 %v309
    %v334 = vunpack.c.h.b16 %v309
    %v335 = vpack.c.b16 %v321, %v319
    %v336 = vpack.c.b16 %v322, %v320
    %v337 = vpack.c.b16 %v325, %v323
    %v338 = vpack.c.b16 %v326, %v324
    %v339 = vpack.c.b16 %v329, %v327
    %v340 = vpack.c.b16 %v330, %v328
    %v341 = vpack.c.b16 %v333, %v331
    %v342 = vpack.c.b16 %v334, %v332
    %v352 = vsel %vm216, %v310, 0
    %354 = vmatprep.subr.bf16.mxu0 0
    %355 = vmatpush1.bf16.msra.mxu0 0
    %356 = vmatprep.subr.bf16.mxu0 0
    %357 = vmatpush1.bf16.msra.mxu0 0
    %358 = vmatprep.subr.bf16.mxu0 0
    %359 = vmatpush1.bf16.msra.mxu0 0
    %360 = vmatprep.subr.bf16.mxu0 0
    %361 = vmatpush1.bf16.msra.mxu0 0
    %362 = vmatprep.subr.bf16.mxu0 %v342
    %363 = vmatpush1.bf16.msra.mxu0 %v341
    %364 = vmatprep.subr.bf16.mxu0 %v340
    %365 = vmatpush1.bf16.msra.mxu0 %v339
    %366 = vmatprep.subr.bf16.mxu0 %v338
    %367 = vmatpush1.bf16.msra.mxu0 %v337
    %368 = vmatprep.subr.bf16.mxu0 %v336
    %369 = vmatpush1.bf16.msra.mxu0 %v335
    %370 = vmatprep.subr.bf16.mxu0 0
    %371 = vmatpush2.bf16.msra.mxu0 0
    %372 = vmatprep.subr.bf16.mxu0 0
    %373 = vmatpush2.bf16.msra.mxu0 0
    %374 = vmatprep.subr.bf16.mxu0 0
    %375 = vmatpush2.bf16.msra.mxu0 0
    %376 = vmatprep.subr.bf16.mxu0 0
    %377 = vmatpush2.bf16.msra.mxu0 0
    %378 = vmatprep.subr.bf16.mxu0 0
    %379 = vmatpush2.bf16.msra.mxu0 0
    %380 = vmatprep.subr.bf16.mxu0 0
    %381 = vmatpush2.bf16.msra.mxu0 0
    %382 = vmatprep.subr.bf16.mxu0 0
    %383 = vmatpush2.bf16.msra.mxu0 0
    %384 = vmatprep.subr.bf16.mxu0 0
    %385 = vmatpush2.bf16.msra.mxu0 0
    %386 = vmatprep.mubr.bf16.mxu0 0
    %387 = vmatmul.mubr.bf16.gmra.mxu0 %v352
    %v388 = vpop.f32.mrf.mxu0
    %v389 = vadd.f32 0.0, %v388
    %v390 = vpop.f32.mrf.mxu0
    %v391 = vadd.f32 0.0, %v390
    %v392 = vpop.f32.mrf.mxu0
    %v393 = vpop.f32.mrf.mxu0
    %394 = vdwg.mxu0
    %v395 = vadd.f32 %v264, %v389
    %v396 = vadd.f32 %v266, %v391
    %v397 = vxor.u32 %v395, 2147483648
    %v398 = vxor.u32 %v396, 2147483648
    %v399 = vmul.f32 %v397, 1.442695
    %v400 = vpow.pop %v399
    %v401 = vmul.f32 %v398, 1.442695
    %v402 = vpow.pop %v401
    %v403 = vadd.f32 %v400, 1.0
    %v404 = vadd.f32 %v402, 1.0
    %v405 = vrcp.pop %v403
    %v406 = vmul.f32 1.0, %v405
    %v407 = vrcp.pop %v404
    %v408 = vmul.f32 1.0, %v407
    %v409 = vtanh.pop %v396
    %v410 = vmul.f32 %v406, %v143
    %v411 = vmul.f32 %v406, %v409
    %413 = vrot.lane.b32.xlu0 %v411, 64
    %v414 = vpop.permute.xlu0 %413
    %v416 = vadd.f32 %v410, %v414
    %v417 = vtanh.pop %v416
    %v418 = vmul.f32 %v408, %v417
    %420 = vrot.lane.b32.xlu0 %v418, 64
    %v421 = vpop.permute.xlu0 %420
    %423 = vst.msk [vmem:[#allocation2] sm:$0xff] %vm216, %v421
    %v424 = vpack.c.bf16 %v418, %v418
    %426 = vrot.lane.b32.xlu0 %v424, 64
    %v427 = vpop.permute.xlu0 %426
    %v429 = vsel %vm216, %v427, 0
    %431 = vmatprep.subr.bf16.mxu0 0
    %432 = vmatpush1.bf16.msra.mxu0 0
    %433 = vmatprep.subr.bf16.mxu0 0
    %434 = vmatpush1.bf16.msra.mxu0 0
    %435 = vmatprep.subr.bf16.mxu0 0
    %436 = vmatpush1.bf16.msra.mxu0 0
    %437 = vmatprep.subr.bf16.mxu0 0
    %438 = vmatpush1.bf16.msra.mxu0 0
    %439 = vmatprep.subr.bf16.mxu0 %v342
    %440 = vmatpush1.bf16.msra.mxu0 %v341
    %441 = vmatprep.subr.bf16.mxu0 %v340
    %442 = vmatpush1.bf16.msra.mxu0 %v339
    %443 = vmatprep.subr.bf16.mxu0 %v338
    %444 = vmatpush1.bf16.msra.mxu0 %v337
    %445 = vmatprep.subr.bf16.mxu0 %v336
    %446 = vmatpush1.bf16.msra.mxu0 %v335
    %447 = vmatprep.subr.bf16.mxu0 0
    %448 = vmatpush2.bf16.msra.mxu0 0
    %449 = vmatprep.subr.bf16.mxu0 0
    %450 = vmatpush2.bf16.msra.mxu0 0
    %451 = vmatprep.subr.bf16.mxu0 0
    %452 = vmatpush2.bf16.msra.mxu0 0
    %453 = vmatprep.subr.bf16.mxu0 0
    %454 = vmatpush2.bf16.msra.mxu0 0
    %455 = vmatprep.subr.bf16.mxu0 0
    %456 = vmatpush2.bf16.msra.mxu0 0
    %457 = vmatprep.subr.bf16.mxu0 0
    %458 = vmatpush2.bf16.msra.mxu0 0
    %459 = vmatprep.subr.bf16.mxu0 0
    %460 = vmatpush2.bf16.msra.mxu0 0
    %461 = vmatprep.subr.bf16.mxu0 0
    %462 = vmatpush2.bf16.msra.mxu0 0
    %463 = vmatprep.mubr.bf16.mxu0 0
    %464 = vmatmul.mubr.bf16.gmra.mxu0 %v429
    %v465 = vpop.f32.mrf.mxu0
    %v466 = vadd.f32 0.0, %v465
    %v467 = vpop.f32.mrf.mxu0
    %v468 = vadd.f32 0.0, %v467
    %v469 = vpop.f32.mrf.mxu0
    %v470 = vpop.f32.mrf.mxu0
    %471 = vdwg.mxu0
    %v472 = vadd.f32 %v268, %v466
    %v473 = vadd.f32 %v270, %v468
    %v474 = vxor.u32 %v472, 2147483648
    %v475 = vxor.u32 %v473, 2147483648
    %v476 = vmul.f32 %v474, 1.442695
    %v477 = vpow.pop %v476
    %v478 = vmul.f32 %v475, 1.442695
    %v479 = vpow.pop %v478
    %v480 = vadd.f32 %v477, 1.0
    %v481 = vadd.f32 %v479, 1.0
    %v482 = vrcp.pop %v480
    %v483 = vmul.f32 1.0, %v482
    %v484 = vrcp.pop %v481
    %v485 = vmul.f32 1.0, %v484
    %v486 = vtanh.pop %v473
    %v487 = vmul.f32 %v483, %v416
    %v488 = vmul.f32 %v483, %v486
    %490 = vrot.lane.b32.xlu0 %v488, 64
    %v491 = vpop.permute.xlu0 %490
    %v493 = vadd.f32 %v487, %v491
    %v494 = vtanh.pop %v493
    %v495 = vmul.f32 %v485, %v494
    %497 = vrot.lane.b32.xlu0 %v495, 64
    %v498 = vpop.permute.xlu0 %497
    %500 = vst.msk [vmem:[#allocation2 + $0x8] sm:$0xff] %vm216, %v498
    %v501 = vpack.c.bf16 %v495, %v495
    %503 = vrot.lane.b32.xlu0 %v501, 64
    %v504 = vpop.permute.xlu0 %503
    %v506 = vsel %vm216, %v504, 0
    %508 = vmatprep.subr.bf16.mxu0 0
    %509 = vmatpush1.bf16.msra.mxu0 0
    %510 = vmatprep.subr.bf16.mxu0 0
    %511 = vmatpush1.bf16.msra.mxu0 0
    %512 = vmatprep.subr.bf16.mxu0 0
    %513 = vmatpush1.bf16.msra.mxu0 0
    %514 = vmatprep.subr.bf16.mxu0 0
    %515 = vmatpush1.bf16.msra.mxu0 0
    %516 = vmatprep.subr.bf16.mxu0 %v342
    %517 = vmatpush1.bf16.msra.mxu0 %v341
    %518 = vmatprep.subr.bf16.mxu0 %v340
    %519 = vmatpush1.bf16.msra.mxu0 %v339
    %520 = vmatprep.subr.bf16.mxu0 %v338
    %521 = vmatpush1.bf16.msra.mxu0 %v337
    %522 = vmatprep.subr.bf16.mxu0 %v336
    %523 = vmatpush1.bf16.msra.mxu0 %v335
    %524 = vmatprep.subr.bf16.mxu0 0
    %525 = vmatpush2.bf16.msra.mxu0 0
    %526 = vmatprep.subr.bf16.mxu0 0
    %527 = vmatpush2.bf16.msra.mxu0 0
    %528 = vmatprep.subr.bf16.mxu0 0
    %529 = vmatpush2.bf16.msra.mxu0 0
    %530 = vmatprep.subr.bf16.mxu0 0
    %531 = vmatpush2.bf16.msra.mxu0 0
    %532 = vmatprep.subr.bf16.mxu0 0
    %533 = vmatpush2.bf16.msra.mxu0 0
    %534 = vmatprep.subr.bf16.mxu0 0
    %535 = vmatpush2.bf16.msra.mxu0 0
    %536 = vmatprep.subr.bf16.mxu0 0
    %537 = vmatpush2.bf16.msra.mxu0 0
    %538 = vmatprep.subr.bf16.mxu0 0
    %539 = vmatpush2.bf16.msra.mxu0 0
    %540 = vmatprep.mubr.bf16.mxu0 0
    %541 = vmatmul.mubr.bf16.gmra.mxu0 %v506
    %v542 = vpop.f32.mrf.mxu0
    %v543 = vadd.f32 0.0, %v542
    %v544 = vpop.f32.mrf.mxu0
    %v545 = vadd.f32 0.0, %v544
    %v546 = vpop.f32.mrf.mxu0
    %v547 = vpop.f32.mrf.mxu0
    %548 = vdwg.mxu0
    %v549 = vadd.f32 %v274, %v543
    %v550 = vadd.f32 %v276, %v545
    %v551 = vxor.u32 %v549, 2147483648
    %v552 = vxor.u32 %v550, 2147483648
    %v553 = vmul.f32 %v551, 1.442695
    %v554 = vpow.pop %v553
    %v555 = vmul.f32 %v552, 1.442695
    %v556 = vpow.pop %v555
    %v557 = vadd.f32 %v554, 1.0
    %v558 = vadd.f32 %v556, 1.0
    %v559 = vrcp.pop %v557
    %v560 = vmul.f32 1.0, %v559
    %v561 = vrcp.pop %v558
    %v562 = vmul.f32 1.0, %v561
    %v563 = vtanh.pop %v550
    %v564 = vmul.f32 %v560, %v493
    %v565 = vmul.f32 %v560, %v563
    %567 = vrot.lane.b32.xlu0 %v565, 64
    %v568 = vpop.permute.xlu0 %567
    %v570 = vadd.f32 %v564, %v568
    %v571 = vtanh.pop %v570
    %v572 = vmul.f32 %v562, %v571
    %574 = vrot.lane.b32.xlu0 %v572, 64
    %v575 = vpop.permute.xlu0 %574
    %577 = vst.msk [vmem:[#allocation2 + $0x10] sm:$0xff] %vm216, %v575
    %v578 = vpack.c.bf16 %v572, %v572
    %580 = vrot.lane.b32.xlu0 %v578, 64
    %v581 = vpop.permute.xlu0 %580
    %v583 = vsel %vm216, %v581, 0
    %585 = vmatprep.subr.bf16.mxu0 0
    %586 = vmatpush1.bf16.msra.mxu0 0
    %587 = vmatprep.subr.bf16.mxu0 0
    %588 = vmatpush1.bf16.msra.mxu0 0
    %589 = vmatprep.subr.bf16.mxu0 0
    %590 = vmatpush1.bf16.msra.mxu0 0
    %591 = vmatprep.subr.bf16.mxu0 0
    %592 = vmatpush1.bf16.msra.mxu0 0
    %593 = vmatprep.subr.bf16.mxu0 %v342
    %594 = vmatpush1.bf16.msra.mxu0 %v341
    %595 = vmatprep.subr.bf16.mxu0 %v340
    %596 = vmatpush1.bf16.msra.mxu0 %v339
    %597 = vmatprep.subr.bf16.mxu0 %v338
    %598 = vmatpush1.bf16.msra.mxu0 %v337
    %599 = vmatprep.subr.bf16.mxu0 %v336
    %600 = vmatpush1.bf16.msra.mxu0 %v335
    %601 = vmatprep.subr.bf16.mxu0 0
    %602 = vmatpush2.bf16.msra.mxu0 0
    %603 = vmatprep.subr.bf16.mxu0 0
    %604 = vmatpush2.bf16.msra.mxu0 0
    %605 = vmatprep.subr.bf16.mxu0 0
    %606 = vmatpush2.bf16.msra.mxu0 0
    %607 = vmatprep.subr.bf16.mxu0 0
    %608 = vmatpush2.bf16.msra.mxu0 0
    %609 = vmatprep.subr.bf16.mxu0 0
    %610 = vmatpush2.bf16.msra.mxu0 0
    %611 = vmatprep.subr.bf16.mxu0 0
    %612 = vmatpush2.bf16.msra.mxu0 0
    %613 = vmatprep.subr.bf16.mxu0 0
    %614 = vmatpush2.bf16.msra.mxu0 0
    %615 = vmatprep.subr.bf16.mxu0 0
    %616 = vmatpush2.bf16.msra.mxu0 0
    %617 = vmatprep.mubr.bf16.mxu0 0
    %618 = vmatmul.mubr.bf16.gmra.mxu0 %v583
    %v619 = vpop.f32.mrf.mxu0
    %v620 = vadd.f32 0.0, %v619
    %v621 = vpop.f32.mrf.mxu0
    %v622 = vadd.f32 0.0, %v621
    %v623 = vpop.f32.mrf.mxu0
    %v624 = vpop.f32.mrf.mxu0
    %625 = vdwg.mxu0
    %v626 = vadd.f32 %v278, %v620
    %v627 = vadd.f32 %v280, %v622
    %v628 = vxor.u32 %v626, 2147483648
    %v629 = vxor.u32 %v627, 2147483648
    %v630 = vmul.f32 %v628, 1.442695
    %v631 = vpow.pop %v630
    %v632 = vmul.f32 %v629, 1.442695
    %v633 = vpow.pop %v632
    %v634 = vadd.f32 %v631, 1.0
    %v635 = vadd.f32 %v633, 1.0
    %v636 = vrcp.pop %v634
    %v637 = vmul.f32 1.0, %v636
    %v638 = vrcp.pop %v635
    %v639 = vmul.f32 1.0, %v638
    %v640 = vtanh.pop %v627
    %v641 = vmul.f32 %v637, %v570
    %v642 = vmul.f32 %v637, %v640
    %644 = vrot.lane.b32.xlu0 %v642, 64
    %v645 = vpop.permute.xlu0 %644
    %v647 = vadd.f32 %v641, %v645
    %v648 = vtanh.pop %v647
    %v649 = vmul.f32 %v639, %v648
    %651 = vrot.lane.b32.xlu0 %v649, 64
    %v652 = vpop.permute.xlu0 %651
    %654 = vst.msk [vmem:[#allocation2 + $0x18] sm:$0xff] %vm216, %v652
    %v655 = vpack.c.bf16 %v649, %v649
    %657 = vrot.lane.b32.xlu0 %v655, 64
    %v658 = vpop.permute.xlu0 %657
    %v660 = vsel %vm216, %v658, 0
    %662 = vmatprep.subr.bf16.mxu0 0
    %663 = vmatpush1.bf16.msra.mxu0 0
    %664 = vmatprep.subr.bf16.mxu0 0
    %665 = vmatpush1.bf16.msra.mxu0 0
    %666 = vmatprep.subr.bf16.mxu0 0
    %667 = vmatpush1.bf16.msra.mxu0 0
    %668 = vmatprep.subr.bf16.mxu0 0
    %669 = vmatpush1.bf16.msra.mxu0 0
    %670 = vmatprep.subr.bf16.mxu0 %v342
    %671 = vmatpush1.bf16.msra.mxu0 %v341
    %672 = vmatprep.subr.bf16.mxu0 %v340
    %673 = vmatpush1.bf16.msra.mxu0 %v339
    %674 = vmatprep.subr.bf16.mxu0 %v338
    %675 = vmatpush1.bf16.msra.mxu0 %v337
    %676 = vmatprep.subr.bf16.mxu0 %v336
    %677 = vmatpush1.bf16.msra.mxu0 %v335
    %678 = vmatprep.subr.bf16.mxu0 0
    %679 = vmatpush2.bf16.msra.mxu0 0
    %680 = vmatprep.subr.bf16.mxu0 0
    %681 = vmatpush2.bf16.msra.mxu0 0
    %682 = vmatprep.subr.bf16.mxu0 0
    %683 = vmatpush2.bf16.msra.mxu0 0
    %684 = vmatprep.subr.bf16.mxu0 0
    %685 = vmatpush2.bf16.msra.mxu0 0
    %686 = vmatprep.subr.bf16.mxu0 0
    %687 = vmatpush2.bf16.msra.mxu0 0
    %688 = vmatprep.subr.bf16.mxu0 0
    %689 = vmatpush2.bf16.msra.mxu0 0
    %690 = vmatprep.subr.bf16.mxu0 0
    %691 = vmatpush2.bf16.msra.mxu0 0
    %692 = vmatprep.subr.bf16.mxu0 0
    %693 = vmatpush2.bf16.msra.mxu0 0
    %694 = vmatprep.mubr.bf16.mxu0 0
    %695 = vmatmul.mubr.bf16.gmra.mxu0 %v660
    %v696 = vpop.f32.mrf.mxu0
    %v697 = vadd.f32 0.0, %v696
    %v698 = vpop.f32.mrf.mxu0
    %v699 = vadd.f32 0.0, %v698
    %v700 = vpop.f32.mrf.mxu0
    %v701 = vpop.f32.mrf.mxu0
    %702 = vdwg.mxu0
    %v703 = vadd.f32 %v284, %v697
    %v704 = vadd.f32 %v286, %v699
    %v705 = vxor.u32 %v703, 2147483648
    %v706 = vxor.u32 %v704, 2147483648
    %v707 = vmul.f32 %v705, 1.442695
    %v708 = vpow.pop %v707
    %v709 = vmul.f32 %v706, 1.442695
    %v710 = vpow.pop %v709
    %v711 = vadd.f32 %v708, 1.0
    %v712 = vadd.f32 %v710, 1.0
    %v713 = vrcp.pop %v711
    %v714 = vmul.f32 1.0, %v713
    %v715 = vrcp.pop %v712
    %v716 = vmul.f32 1.0, %v715
    %v717 = vtanh.pop %v704
    %v718 = vmul.f32 %v714, %v647
    %v719 = vmul.f32 %v714, %v717
    %721 = vrot.lane.b32.xlu0 %v719, 64
    %v722 = vpop.permute.xlu0 %721
    %v724 = vadd.f32 %v718, %v722
    %v725 = vtanh.pop %v724
    %v726 = vmul.f32 %v716, %v725
    %728 = vrot.lane.b32.xlu0 %v726, 64
    %v729 = vpop.permute.xlu0 %728
    %731 = vst.msk [vmem:[#allocation2 + $0x20] sm:$0xff] %vm216, %v729
    %v732 = vpack.c.bf16 %v726, %v726
    %734 = vrot.lane.b32.xlu0 %v732, 64
    %v735 = vpop.permute.xlu0 %734
    %v737 = vsel %vm216, %v735, 0
    %739 = vmatprep.subr.bf16.mxu0 0
    %740 = vmatpush1.bf16.msra.mxu0 0
    %741 = vmatprep.subr.bf16.mxu0 0
    %742 = vmatpush1.bf16.msra.mxu0 0
    %743 = vmatprep.subr.bf16.mxu0 0
    %744 = vmatpush1.bf16.msra.mxu0 0
    %745 = vmatprep.subr.bf16.mxu0 0
    %746 = vmatpush1.bf16.msra.mxu0 0
    %747 = vmatprep.subr.bf16.mxu0 %v342
    %748 = vmatpush1.bf16.msra.mxu0 %v341
    %749 = vmatprep.subr.bf16.mxu0 %v340
    %750 = vmatpush1.bf16.msra.mxu0 %v339
    %751 = vmatprep.subr.bf16.mxu0 %v338
    %752 = vmatpush1.bf16.msra.mxu0 %v337
    %753 = vmatprep.subr.bf16.mxu0 %v336
    %754 = vmatpush1.bf16.msra.mxu0 %v335
    %755 = vmatprep.subr.bf16.mxu0 0
    %756 = vmatpush2.bf16.msra.mxu0 0
    %757 = vmatprep.subr.bf16.mxu0 0
    %758 = vmatpush2.bf16.msra.mxu0 0
    %759 = vmatprep.subr.bf16.mxu0 0
    %760 = vmatpush2.bf16.msra.mxu0 0
    %761 = vmatprep.subr.bf16.mxu0 0
    %762 = vmatpush2.bf16.msra.mxu0 0
    %763 = vmatprep.subr.bf16.mxu0 0
    %764 = vmatpush2.bf16.msra.mxu0 0
    %765 = vmatprep.subr.bf16.mxu0 0
    %766 = vmatpush2.bf16.msra.mxu0 0
    %767 = vmatprep.subr.bf16.mxu0 0
    %768 = vmatpush2.bf16.msra.mxu0 0
    %769 = vmatprep.subr.bf16.mxu0 0
    %770 = vmatpush2.bf16.msra.mxu0 0
    %771 = vmatprep.mubr.bf16.mxu0 0
    %772 = vmatmul.mubr.bf16.gmra.mxu0 %v737
    %v773 = vpop.f32.mrf.mxu0
    %v774 = vadd.f32 0.0, %v773
    %v775 = vpop.f32.mrf.mxu0
    %v776 = vadd.f32 0.0, %v775
    %v777 = vpop.f32.mrf.mxu0
    %v778 = vpop.f32.mrf.mxu0
    %779 = vdwg.mxu0
    %v780 = vadd.f32 %v288, %v774
    %v781 = vadd.f32 %v290, %v776
    %v782 = vxor.u32 %v780, 2147483648
    %v783 = vxor.u32 %v781, 2147483648
    %v784 = vmul.f32 %v782, 1.442695
    %v785 = vpow.pop %v784
    %v786 = vmul.f32 %v783, 1.442695
    %v787 = vpow.pop %v786
    %v788 = vadd.f32 %v785, 1.0
    %v789 = vadd.f32 %v787, 1.0
    %v790 = vrcp.pop %v788
    %v791 = vmul.f32 1.0, %v790
    %v792 = vrcp.pop %v789
    %v793 = vmul.f32 1.0, %v792
    %v794 = vtanh.pop %v781
    %v795 = vmul.f32 %v791, %v724
    %v796 = vmul.f32 %v791, %v794
    %798 = vrot.lane.b32.xlu0 %v796, 64
    %v799 = vpop.permute.xlu0 %798
    %v801 = vadd.f32 %v795, %v799
    %v802 = vtanh.pop %v801
    %v803 = vmul.f32 %v793, %v802
    %805 = vrot.lane.b32.xlu0 %v803, 64
    %v806 = vpop.permute.xlu0 %805
    %808 = vst.msk [vmem:[#allocation2 + $0x28] sm:$0xff] %vm216, %v806
    %v809 = vpack.c.bf16 %v803, %v803
    %811 = vrot.lane.b32.xlu0 %v809, 64
    %v812 = vpop.permute.xlu0 %811
    %v814 = vsel %vm216, %v812, 0
    %816 = vmatprep.subr.bf16.mxu0 0
    %817 = vmatpush1.bf16.msra.mxu0 0
    %818 = vmatprep.subr.bf16.mxu0 0
    %819 = vmatpush1.bf16.msra.mxu0 0
    %820 = vmatprep.subr.bf16.mxu0 0
    %821 = vmatpush1.bf16.msra.mxu0 0
    %822 = vmatprep.subr.bf16.mxu0 0
    %823 = vmatpush1.bf16.msra.mxu0 0
    %824 = vmatprep.subr.bf16.mxu0 %v342
    %825 = vmatpush1.bf16.msra.mxu0 %v341
    %826 = vmatprep.subr.bf16.mxu0 %v340
    %827 = vmatpush1.bf16.msra.mxu0 %v339
    %828 = vmatprep.subr.bf16.mxu0 %v338
    %829 = vmatpush1.bf16.msra.mxu0 %v337
    %830 = vmatprep.subr.bf16.mxu0 %v336
    %831 = vmatpush1.bf16.msra.mxu0 %v335
    %832 = vmatprep.subr.bf16.mxu0 0
    %833 = vmatpush2.bf16.msra.mxu0 0
    %834 = vmatprep.subr.bf16.mxu0 0
    %835 = vmatpush2.bf16.msra.mxu0 0
    %836 = vmatprep.subr.bf16.mxu0 0
    %837 = vmatpush2.bf16.msra.mxu0 0
    %838 = vmatprep.subr.bf16.mxu0 0
    %839 = vmatpush2.bf16.msra.mxu0 0
    %840 = vmatprep.subr.bf16.mxu0 0
    %841 = vmatpush2.bf16.msra.mxu0 0
    %842 = vmatprep.subr.bf16.mxu0 0
    %843 = vmatpush2.bf16.msra.mxu0 0
    %844 = vmatprep.subr.bf16.mxu0 0
    %845 = vmatpush2.bf16.msra.mxu0 0
    %846 = vmatprep.subr.bf16.mxu0 0
    %847 = vmatpush2.bf16.msra.mxu0 0
    %848 = vmatprep.mubr.bf16.mxu0 0
    %849 = vmatmul.mubr.bf16.gmra.mxu0 %v814
    %v850 = vpop.f32.mrf.mxu0
    %v851 = vadd.f32 0.0, %v850
    %v852 = vpop.f32.mrf.mxu0
    %v853 = vadd.f32 0.0, %v852
    %v854 = vpop.f32.mrf.mxu0
    %v855 = vpop.f32.mrf.mxu0
    %856 = vdwg.mxu0
    %v857 = vadd.f32 %v294, %v851
    %v858 = vadd.f32 %v296, %v853
    %v859 = vxor.u32 %v857, 2147483648
    %v860 = vxor.u32 %v858, 2147483648
    %v861 = vmul.f32 %v859, 1.442695
    %v862 = vpow.pop %v861
    %v863 = vmul.f32 %v860, 1.442695
    %v864 = vpow.pop %v863
    %v865 = vadd.f32 %v862, 1.0
    %v866 = vadd.f32 %v864, 1.0
    %v867 = vrcp.pop %v865
    %v868 = vmul.f32 1.0, %v867
    %v869 = vrcp.pop %v866
    %v870 = vmul.f32 1.0, %v869
    %v871 = vtanh.pop %v858
    %v872 = vmul.f32 %v868, %v801
    %v873 = vmul.f32 %v868, %v871
    %875 = vrot.lane.b32.xlu0 %v873, 64
    %v876 = vpop.permute.xlu0 %875
    %v878 = vadd.f32 %v872, %v876
    %v879 = vtanh.pop %v878
    %v880 = vmul.f32 %v870, %v879
    %882 = vrot.lane.b32.xlu0 %v880, 64
    %v883 = vpop.permute.xlu0 %882
    %885 = vst.msk [vmem:[#allocation2 + $0x30] sm:$0xff] %vm216, %v883
    %v886 = vpack.c.bf16 %v880, %v880
    %888 = vrot.lane.b32.xlu0 %v886, 64
    %v889 = vpop.permute.xlu0 %888
    %v891 = vsel %vm216, %v889, 0
    %893 = vmatprep.subr.bf16.mxu0 0
    %894 = vmatpush1.bf16.msra.mxu0 0
    %895 = vmatprep.subr.bf16.mxu0 0
    %896 = vmatpush1.bf16.msra.mxu0 0
    %897 = vmatprep.subr.bf16.mxu0 0
    %898 = vmatpush1.bf16.msra.mxu0 0
    %899 = vmatprep.subr.bf16.mxu0 0
    %900 = vmatpush1.bf16.msra.mxu0 0
    %901 = vmatprep.subr.bf16.mxu0 %v342
    %902 = vmatpush1.bf16.msra.mxu0 %v341
    %903 = vmatprep.subr.bf16.mxu0 %v340
    %904 = vmatpush1.bf16.msra.mxu0 %v339
    %905 = vmatprep.subr.bf16.mxu0 %v338
    %906 = vmatpush1.bf16.msra.mxu0 %v337
    %907 = vmatprep.subr.bf16.mxu0 %v336
    %908 = vmatpush1.bf16.msra.mxu0 %v335
    %909 = vmatprep.subr.bf16.mxu0 0
    %910 = vmatpush2.bf16.msra.mxu0 0
    %911 = vmatprep.subr.bf16.mxu0 0
    %912 = vmatpush2.bf16.msra.mxu0 0
    %913 = vmatprep.subr.bf16.mxu0 0
    %914 = vmatpush2.bf16.msra.mxu0 0
    %915 = vmatprep.subr.bf16.mxu0 0
    %916 = vmatpush2.bf16.msra.mxu0 0
    %917 = vmatprep.subr.bf16.mxu0 0
    %918 = vmatpush2.bf16.msra.mxu0 0
    %919 = vmatprep.subr.bf16.mxu0 0
    %920 = vmatpush2.bf16.msra.mxu0 0
    %921 = vmatprep.subr.bf16.mxu0 0
    %922 = vmatpush2.bf16.msra.mxu0 0
    %923 = vmatprep.subr.bf16.mxu0 0
    %924 = vmatpush2.bf16.msra.mxu0 0
    %925 = vmatprep.mubr.bf16.mxu0 0
    %926 = vmatmul.mubr.bf16.gmra.mxu0 %v891
    %v927 = vpop.f32.mrf.mxu0
    %v928 = vadd.f32 0.0, %v927
    %v929 = vpop.f32.mrf.mxu0
    %v930 = vadd.f32 0.0, %v929
    %v931 = vpop.f32.mrf.mxu0
    %v932 = vpop.f32.mrf.mxu0
    %933 = vdwg.mxu0
    %v934 = vadd.f32 %v298, %v928
    %v935 = vadd.f32 %v300, %v930
    %v936 = vxor.u32 %v934, 2147483648
    %v937 = vxor.u32 %v935, 2147483648
    %v938 = vmul.f32 %v936, 1.442695
    %v939 = vpow.pop %v938
    %v940 = vmul.f32 %v937, 1.442695
    %v941 = vpow.pop %v940
    %v942 = vadd.f32 %v939, 1.0
    %v943 = vadd.f32 %v941, 1.0
    %v944 = vrcp.pop %v942
    %v945 = vmul.f32 1.0, %v944
    %v946 = vrcp.pop %v943
    %v947 = vmul.f32 1.0, %v946
    %v948 = vtanh.pop %v935
    %v949 = vmul.f32 %v945, %v878
    %v950 = vmul.f32 %v945, %v948
    %952 = vrot.lane.b32.xlu0 %v950, 64
    %v953 = vpop.permute.xlu0 %952
    %v955 = vadd.f32 %v949, %v953
    %v956 = vtanh.pop %v955
    %v957 = vmul.f32 %v947, %v956
    %959 = vrot.lane.b32.xlu0 %v957, 64
    %v960 = vpop.permute.xlu0 %959
    %962 = vst.msk [vmem:[#allocation2 + $0x38] sm:$0xff] %vm216, %v960
    %v963 = vsel %vm216, %v960, %v955
    %964 = vst [vmem:[%s10] sm:$0xff] %v963
    %v965 = vld [vmem:[#allocation2] sm:$0xff]
    %v966 = vld [vmem:[#allocation2 + $0x8] sm:$0xff]
    %v967 = vld [vmem:[#allocation2 + $0x10] sm:$0xff]
    %v968 = vld [vmem:[#allocation2 + $0x18] sm:$0xff]
    %v969 = vld [vmem:[#allocation2 + $0x20] sm:$0xff]
    %v970 = vld [vmem:[#allocation2 + $0x28] sm:$0xff]
    %v971 = vld [vmem:[#allocation2 + $0x30] sm:$0xff]
    %v972 = vld [vmem:[#allocation2 + $0x38] sm:$0xff]
    %v973 = vpack.c.bf16 %v966, %v965
    %v974 = vpack.c.bf16 %v968, %v967
    %v975 = vpack.c.bf16 %v970, %v969
    %v976 = vpack.c.bf16 %v972, %v971
    %v977 = vld [vmem:[%s7] sm:$0xf]
    %v978 = vld [vmem:[%s7 + $0x4] sm:$0xf]
    %v979 = vld [vmem:[%s7 + $0x8] sm:$0xf]
    %v980 = vld [vmem:[%s7 + $0xc] sm:$0xf]
    %v981 = vld [vmem:[%s7 + $0x10] sm:$0xf]
    %v982 = vld [vmem:[%s7 + $0x14] sm:$0xf]
    %v983 = vld [vmem:[%s7 + $0x18] sm:$0xf]
    %v984 = vld [vmem:[%s7 + $0x1c] sm:$0xf]
    %v985 = vld [vmem:[%s8] sm:$0x1]
    %v987 = vlaneseq
    %v988 = vshrl.u32 %v987, 7
    %v989 = vsub.s32 0, %v988
    %v990 = vrot.slane %v985, %v989
    %v1000 = vunpack.c.l.b16 %v977
    %v1001 = vunpack.c.l.b16 %v978
    %v1002 = vunpack.c.l.b16 %v979
    %v1003 = vunpack.c.l.b16 %v980
    %v1004 = vunpack.c.l.b16 %v981
    %v1005 = vunpack.c.l.b16 %v982
    %v1006 = vunpack.c.l.b16 %v983
    %v1007 = vunpack.c.l.b16 %v984
    %v1008 = vpack.c.b16 %v1001, %v1000
    %v1009 = vpack.c.b16 %v1003, %v1002
    %v1010 = vpack.c.b16 %v1005, %v1004
    %v1011 = vpack.c.b16 %v1007, %v1006
    %v1017 = vsel %vm216, %v973, 0
    %v1020 = vsel %vm216, %v974, 0
    %v1023 = vsel %vm216, %v975, 0
    %v1026 = vsel %vm216, %v976, 0
    %1028 = vmatprep.subr.bf16.mxu0 0
    %1029 = vmatpush1.bf16.msra.mxu0 0
    %1030 = vmatprep.subr.bf16.mxu0 0
    %1031 = vmatpush1.bf16.msra.mxu0 0
    %1032 = vmatprep.subr.bf16.mxu0 0
    %1033 = vmatpush1.bf16.msra.mxu0 0
    %1034 = vmatprep.subr.bf16.mxu0 0
    %1035 = vmatpush1.bf16.msra.mxu0 0
    %1036 = vmatprep.subr.bf16.mxu0 0
    %1037 = vmatpush1.bf16.msra.mxu0 %v1011
    %1038 = vmatprep.subr.bf16.mxu0 0
    %1039 = vmatpush1.bf16.msra.mxu0 %v1010
    %1040 = vmatprep.subr.bf16.mxu0 0
    %1041 = vmatpush1.bf16.msra.mxu0 %v1009
    %1042 = vmatprep.subr.bf16.mxu0 0
    %1043 = vmatpush1.bf16.msra.mxu0 %v1008
    %1044 = vmatprep.subr.bf16.mxu0 0
    %1045 = vmatpush2.bf16.msra.mxu0 0
    %1046 = vmatprep.subr.bf16.mxu0 0
    %1047 = vmatpush2.bf16.msra.mxu0 0
    %1048 = vmatprep.subr.bf16.mxu0 0
    %1049 = vmatpush2.bf16.msra.mxu0 0
    %1050 = vmatprep.subr.bf16.mxu0 0
    %1051 = vmatpush2.bf16.msra.mxu0 0
    %1052 = vmatprep.subr.bf16.mxu0 0
    %1053 = vmatpush2.bf16.msra.mxu0 0
    %1054 = vmatprep.subr.bf16.mxu0 0
    %1055 = vmatpush2.bf16.msra.mxu0 0
    %1056 = vmatprep.subr.bf16.mxu0 0
    %1057 = vmatpush2.bf16.msra.mxu0 0
    %1058 = vmatprep.subr.bf16.mxu0 0
    %1059 = vmatpush2.bf16.msra.mxu0 0
    %1060 = vmatprep.mubr.bf16.mxu0 0
    %1061 = vmatmul.mubr.bf16.gmra.mxu0 %v1017
    %v1062 = vpop.f32.mrf.mxu0
    %v1063 = vadd.f32 %v990, %v1062
    %v1064 = vpop.f32.mrf.mxu0
    %v1065 = vpop.f32.mrf.mxu0
    %v1066 = vadd.f32 %v990, %v1065
    %v1067 = vpop.f32.mrf.mxu0
    %1068 = vmatprep.mubr.bf16.mxu0 0
    %1069 = vmatmul.mubr.bf16.gmra.mxu0 %v1020
    %v1070 = vpop.f32.mrf.mxu0
    %v1071 = vadd.f32 %v990, %v1070
    %v1072 = vpop.f32.mrf.mxu0
    %v1073 = vpop.f32.mrf.mxu0
    %v1074 = vadd.f32 %v990, %v1073
    %v1075 = vpop.f32.mrf.mxu0
    %1076 = vmatprep.mubr.bf16.mxu0 0
    %1077 = vmatmul.mubr.bf16.gmra.mxu0 %v1023
    %v1078 = vpop.f32.mrf.mxu0
    %v1079 = vadd.f32 %v990, %v1078
    %v1080 = vpop.f32.mrf.mxu0
    %v1081 = vpop.f32.mrf.mxu0
    %v1082 = vadd.f32 %v990, %v1081
    %v1083 = vpop.f32.mrf.mxu0
    %1084 = vmatprep.mubr.bf16.mxu0 0
    %1085 = vmatmul.mubr.bf16.gmra.mxu0 %v1026
    %v1086 = vpop.f32.mrf.mxu0
    %v1087 = vadd.f32 %v990, %v1086
    %v1088 = vpop.f32.mrf.mxu0
    %v1089 = vpop.f32.mrf.mxu0
    %v1090 = vadd.f32 %v990, %v1089
    %v1091 = vpop.f32.mrf.mxu0
    %1092 = vdwg.mxu0
    %v1093 = vlaneseq
    %v1094 = vand.u32 %v1093, 127
    %vm1095 = vcmp.lt.s32.totalorder %v1094, 20
    %vm1096 = vcmp.ge.s32.totalorder %v1094, 60
    %vm1097 = vcmp.lt.s32.totalorder %v1094, 100
    %vm1098 = vmand %vm1096, %vm1097
    %vm1099 = vcmp.ge.s32.totalorder %v1094, 100
    %vm1100 = vcmp.lt.s32.totalorder %v1094, 120
    %vm1101 = vmand %vm1099, %vm1100
    %vm1102 = vcmp.ge.s32.totalorder %v1094, 120
    %vm1103 = vcmp.lt.s32.totalorder %v1094, 123
    %vm1104 = vmand %vm1102, %vm1103
    %v1105 = vsel %vm1095, %v1063, -1e+30
    %v1106 = vsel %vm1095, %v1066, -1e+30
    %v1107 = vsel %vm1095, %v1071, -1e+30
    %v1108 = vsel %vm1095, %v1074, -1e+30
    %v1109 = vsel %vm1095, %v1079, -1e+30
    %v1110 = vsel %vm1095, %v1082, -1e+30
    %v1111 = vsel %vm1095, %v1087, -1e+30
    %v1112 = vsel %vm1095, %v1090, -1e+30
    %1113 = vmax.xlane.f32.xlu0 %v1105
    %v1114 = vpop.xlane.xlu0 %1113
    %1115 = vmax.xlane.f32.xlu0 %v1106
    %v1116 = vpop.xlane.xlu0 %1115
    %1117 = vmax.xlane.f32.xlu0 %v1107
    %v1118 = vpop.xlane.xlu0 %1117
    %1119 = vmax.xlane.f32.xlu0 %v1108
    %v1120 = vpop.xlane.xlu0 %1119
    %1121 = vmax.xlane.f32.xlu0 %v1109
    %v1122 = vpop.xlane.xlu0 %1121
    %1123 = vmax.xlane.f32.xlu0 %v1110
    %v1124 = vpop.xlane.xlu0 %1123
    %1125 = vmax.xlane.f32.xlu0 %v1111
    %v1126 = vpop.xlane.xlu0 %1125
    %1127 = vmax.xlane.f32.xlu0 %v1112
    %v1128 = vpop.xlane.xlu0 %1127
    %v1129 = vsel %vm1104, %v1063, -1e+30
    %v1130 = vsel %vm1104, %v1066, -1e+30
    %v1131 = vsel %vm1104, %v1071, -1e+30
    %v1132 = vsel %vm1104, %v1074, -1e+30
    %v1133 = vsel %vm1104, %v1079, -1e+30
    %v1134 = vsel %vm1104, %v1082, -1e+30
    %v1135 = vsel %vm1104, %v1087, -1e+30
    %v1136 = vsel %vm1104, %v1090, -1e+30
    %1137 = vmax.xlane.f32.xlu0 %v1129
    %v1138 = vpop.xlane.xlu0 %1137
    %1139 = vmax.xlane.f32.xlu0 %v1130
    %v1140 = vpop.xlane.xlu0 %1139
    %1141 = vmax.xlane.f32.xlu0 %v1131
    %v1142 = vpop.xlane.xlu0 %1141
    %1143 = vmax.xlane.f32.xlu0 %v1132
    %v1144 = vpop.xlane.xlu0 %1143
    %1145 = vmax.xlane.f32.xlu0 %v1133
    %v1146 = vpop.xlane.xlu0 %1145
    %1147 = vmax.xlane.f32.xlu0 %v1134
    %v1148 = vpop.xlane.xlu0 %1147
    %1149 = vmax.xlane.f32.xlu0 %v1135
    %v1150 = vpop.xlane.xlu0 %1149
    %1151 = vmax.xlane.f32.xlu0 %v1136
    %v1152 = vpop.xlane.xlu0 %1151
    %v1153 = vsel %vm1104, %v1138, 0.0
    %v1154 = vsel %vm1104, %v1140, 0.0
    %v1155 = vsel %vm1104, %v1142, 0.0
    %v1156 = vsel %vm1104, %v1144, 0.0
    %v1157 = vsel %vm1104, %v1146, 0.0
    %v1158 = vsel %vm1104, %v1148, 0.0
    %v1159 = vsel %vm1104, %v1150, 0.0
    %v1160 = vsel %vm1104, %v1152, 0.0
    %v1161 = vsel %vm1095, %v1114, %v1153
    %v1162 = vsel %vm1095, %v1116, %v1154
    %v1163 = vsel %vm1095, %v1118, %v1155
    %v1164 = vsel %vm1095, %v1120, %v1156
    %v1165 = vsel %vm1095, %v1122, %v1157
    %v1166 = vsel %vm1095, %v1124, %v1158
    %v1167 = vsel %vm1095, %v1126, %v1159
    %v1168 = vsel %vm1095, %v1128, %v1160
    %v1169 = vsub.f32 %v1063, %v1161
    %v1170 = vsub.f32 %v1066, %v1162
    %v1171 = vsub.f32 %v1071, %v1163
    %v1172 = vsub.f32 %v1074, %v1164
    %v1173 = vsub.f32 %v1079, %v1165
    %v1174 = vsub.f32 %v1082, %v1166
    %v1175 = vsub.f32 %v1087, %v1167
    %v1176 = vsub.f32 %v1090, %v1168
    %v1177 = vmul.f32 %v1169, 1.442695
    %v1178 = vpow.pop %v1177
    %v1179 = vmul.f32 %v1170, 1.442695
    %v1180 = vpow.pop %v1179
    %v1181 = vmul.f32 %v1171, 1.442695
    %v1182 = vpow.pop %v1181
    %v1183 = vmul.f32 %v1172, 1.442695
    %v1184 = vpow.pop %v1183
    %v1185 = vmul.f32 %v1173, 1.442695
    %v1186 = vpow.pop %v1185
    %v1187 = vmul.f32 %v1174, 1.442695
    %v1188 = vpow.pop %v1187
    %v1189 = vmul.f32 %v1175, 1.442695
    %v1190 = vpow.pop %v1189
    %v1191 = vmul.f32 %v1176, 1.442695
    %v1192 = vpow.pop %v1191
    %v1193 = vtanh.pop %v1063
    %v1194 = vtanh.pop %v1066
    %v1195 = vtanh.pop %v1071
    %v1196 = vtanh.pop %v1074
    %v1197 = vtanh.pop %v1079
    %v1198 = vtanh.pop %v1082
    %v1199 = vtanh.pop %v1087
    %v1200 = vtanh.pop %v1090
    %v1201 = vsel %vm1095, %v1178, 0.0
    %v1202 = vsel %vm1095, %v1180, 0.0
    %v1203 = vsel %vm1095, %v1182, 0.0
    %v1204 = vsel %vm1095, %v1184, 0.0
    %v1205 = vsel %vm1095, %v1186, 0.0
    %v1206 = vsel %vm1095, %v1188, 0.0
    %v1207 = vsel %vm1095, %v1190, 0.0
    %v1208 = vsel %vm1095, %v1192, 0.0
    %1209 = vadd.xlane.f32.xlu0 %v1201
    %v1210 = vpop.xlane.xlu0 %1209
    %1211 = vadd.xlane.f32.xlu0 %v1202
    %v1212 = vpop.xlane.xlu0 %1211
    %1213 = vadd.xlane.f32.xlu0 %v1203
    %v1214 = vpop.xlane.xlu0 %1213
    %1215 = vadd.xlane.f32.xlu0 %v1204
    %v1216 = vpop.xlane.xlu0 %1215
    %1217 = vadd.xlane.f32.xlu0 %v1205
    %v1218 = vpop.xlane.xlu0 %1217
    %1219 = vadd.xlane.f32.xlu0 %v1206
    %v1220 = vpop.xlane.xlu0 %1219
    %1221 = vadd.xlane.f32.xlu0 %v1207
    %v1222 = vpop.xlane.xlu0 %1221
    %1223 = vadd.xlane.f32.xlu0 %v1208
    %v1224 = vpop.xlane.xlu0 %1223
    %v1225 = vsel %vm1104, %v1178, 0.0
    %v1226 = vsel %vm1104, %v1180, 0.0
    %v1227 = vsel %vm1104, %v1182, 0.0
    %v1228 = vsel %vm1104, %v1184, 0.0
    %v1229 = vsel %vm1104, %v1186, 0.0
    %v1230 = vsel %vm1104, %v1188, 0.0
    %v1231 = vsel %vm1104, %v1190, 0.0
    %v1232 = vsel %vm1104, %v1192, 0.0
    %1233 = vadd.xlane.f32.xlu0 %v1225
    %v1234 = vpop.xlane.xlu0 %1233
    %1235 = vadd.xlane.f32.xlu0 %v1226
    %v1236 = vpop.xlane.xlu0 %1235
    %1237 = vadd.xlane.f32.xlu0 %v1227
    %v1238 = vpop.xlane.xlu0 %1237
    %1239 = vadd.xlane.f32.xlu0 %v1228
    %v1240 = vpop.xlane.xlu0 %1239
    %1241 = vadd.xlane.f32.xlu0 %v1229
    %v1242 = vpop.xlane.xlu0 %1241
    %1243 = vadd.xlane.f32.xlu0 %v1230
    %v1244 = vpop.xlane.xlu0 %1243
    %1245 = vadd.xlane.f32.xlu0 %v1231
    %v1246 = vpop.xlane.xlu0 %1245
    %1247 = vadd.xlane.f32.xlu0 %v1232
    %v1248 = vpop.xlane.xlu0 %1247
    %v1249 = vrcp.pop %v1210
    %v1250 = vrcp.pop %v1212
    %v1251 = vrcp.pop %v1214
    %v1252 = vrcp.pop %v1216
    %v1253 = vrcp.pop %v1218
    %v1254 = vrcp.pop %v1220
    %v1255 = vrcp.pop %v1222
    %v1256 = vrcp.pop %v1224
    %v1257 = vmul.f32 %v1210, %v1249
    %v1258 = vmul.f32 %v1212, %v1250
    %v1259 = vmul.f32 %v1214, %v1251
    %v1260 = vmul.f32 %v1216, %v1252
    %v1261 = vmul.f32 %v1218, %v1253
    %v1262 = vmul.f32 %v1220, %v1254
    %v1263 = vmul.f32 %v1222, %v1255
    %v1264 = vmul.f32 %v1224, %v1256
    %v1265 = vsub.f32 2.0, %v1257
    %v1266 = vsub.f32 2.0, %v1258
    %v1267 = vsub.f32 2.0, %v1259
    %v1268 = vsub.f32 2.0, %v1260
    %v1269 = vsub.f32 2.0, %v1261
    %v1270 = vsub.f32 2.0, %v1262
    %v1271 = vsub.f32 2.0, %v1263
    %v1272 = vsub.f32 2.0, %v1264
    %v1273 = vmul.f32 %v1249, %v1265
    %v1274 = vmul.f32 %v1250, %v1266
    %v1275 = vmul.f32 %v1251, %v1267
    %v1276 = vmul.f32 %v1252, %v1268
    %v1277 = vmul.f32 %v1253, %v1269
    %v1278 = vmul.f32 %v1254, %v1270
    %v1279 = vmul.f32 %v1255, %v1271
    %v1280 = vmul.f32 %v1256, %v1272
    %v1281 = vrcp.pop %v1234
    %v1282 = vrcp.pop %v1236
    %v1283 = vrcp.pop %v1238
    %v1284 = vrcp.pop %v1240
    %v1285 = vrcp.pop %v1242
    %v1286 = vrcp.pop %v1244
    %v1287 = vrcp.pop %v1246
    %v1288 = vrcp.pop %v1248
    %v1289 = vmul.f32 %v1234, %v1281
    %v1290 = vmul.f32 %v1236, %v1282
    %v1291 = vmul.f32 %v1238, %v1283
    %v1292 = vmul.f32 %v1240, %v1284
    %v1293 = vmul.f32 %v1242, %v1285
    %v1294 = vmul.f32 %v1244, %v1286
    %v1295 = vmul.f32 %v1246, %v1287
    %v1296 = vmul.f32 %v1248, %v1288
    %v1297 = vsub.f32 2.0, %v1289
    %v1298 = vsub.f32 2.0, %v1290
    %v1299 = vsub.f32 2.0, %v1291
    %v1300 = vsub.f32 2.0, %v1292
    %v1301 = vsub.f32 2.0, %v1293
    %v1302 = vsub.f32 2.0, %v1294
    %v1303 = vsub.f32 2.0, %v1295
    %v1304 = vsub.f32 2.0, %v1296
    %v1305 = vmul.f32 %v1281, %v1297
    %v1306 = vmul.f32 %v1282, %v1298
    %v1307 = vmul.f32 %v1283, %v1299
    %v1308 = vmul.f32 %v1284, %v1300
    %v1309 = vmul.f32 %v1285, %v1301
    %v1310 = vmul.f32 %v1286, %v1302
    %v1311 = vmul.f32 %v1287, %v1303
    %v1312 = vmul.f32 %v1288, %v1304
    %v1313 = vsel %vm1098, %v1178, %v1063
    %v1314 = vsel %vm1098, %v1180, %v1066
    %v1315 = vsel %vm1098, %v1182, %v1071
    %v1316 = vsel %vm1098, %v1184, %v1074
    %v1317 = vsel %vm1098, %v1186, %v1079
    %v1318 = vsel %vm1098, %v1188, %v1082
    %v1319 = vsel %vm1098, %v1190, %v1087
    %v1320 = vsel %vm1098, %v1192, %v1090
    %v1321 = vsel %vm1101, %v1193, %v1313
    %v1322 = vsel %vm1101, %v1194, %v1314
    %v1323 = vsel %vm1101, %v1195, %v1315
    %v1324 = vsel %vm1101, %v1196, %v1316
    %v1325 = vsel %vm1101, %v1197, %v1317
    %v1326 = vsel %vm1101, %v1198, %v1318
    %v1327 = vsel %vm1101, %v1199, %v1319
    %v1328 = vsel %vm1101, %v1200, %v1320
    %v1329 = vmul.f32 %v1178, %v1273
    %v1330 = vmul.f32 %v1180, %v1274
    %v1331 = vmul.f32 %v1182, %v1275
    %v1332 = vmul.f32 %v1184, %v1276
    %v1333 = vmul.f32 %v1186, %v1277
    %v1334 = vmul.f32 %v1188, %v1278
    %v1335 = vmul.f32 %v1190, %v1279
    %v1336 = vmul.f32 %v1192, %v1280
    %v1337 = vsel %vm1095, %v1329, %v1321
    %v1338 = vsel %vm1095, %v1330, %v1322
    %v1339 = vsel %vm1095, %v1331, %v1323
    %v1340 = vsel %vm1095, %v1332, %v1324
    %v1341 = vsel %vm1095, %v1333, %v1325
    %v1342 = vsel %vm1095, %v1334, %v1326
    %v1343 = vsel %vm1095, %v1335, %v1327
    %v1344 = vsel %vm1095, %v1336, %v1328
    %v1345 = vmul.f32 %v1178, %v1305
    %v1346 = vmul.f32 %v1180, %v1306
    %v1347 = vmul.f32 %v1182, %v1307
    %v1348 = vmul.f32 %v1184, %v1308
    %v1349 = vmul.f32 %v1186, %v1309
    %v1350 = vmul.f32 %v1188, %v1310
    %v1351 = vmul.f32 %v1190, %v1311
    %v1352 = vmul.f32 %v1192, %v1312
    %v1353 = vsel %vm1104, %v1345, %v1337
    %v1354 = vsel %vm1104, %v1346, %v1338
    %v1355 = vsel %vm1104, %v1347, %v1339
    %v1356 = vsel %vm1104, %v1348, %v1340
    %v1357 = vsel %vm1104, %v1349, %v1341
    %v1358 = vsel %vm1104, %v1350, %v1342
    %v1359 = vsel %vm1104, %v1351, %v1343
    %v1360 = vsel %vm1104, %v1352, %v1344
    %v1361 = vsel %vm1103, %v1353, 0.0
    %v1362 = vsel %vm1103, %v1354, 0.0
    %v1363 = vsel %vm1103, %v1355, 0.0
    %v1364 = vsel %vm1103, %v1356, 0.0
    %v1365 = vsel %vm1103, %v1357, 0.0
    %v1366 = vsel %vm1103, %v1358, 0.0
    %v1367 = vsel %vm1103, %v1359, 0.0
    %v1368 = vsel %vm1103, %v1360, 0.0
    %1369 = vst [vmem:[%s9] sm:$0xff] %v1361
    %1370 = vst [vmem:[%s9 + $0x8] sm:$0xff] %v1362
    %1371 = vst [vmem:[%s9 + $0x10] sm:$0xff] %v1363
    %1372 = vst [vmem:[%s9 + $0x18] sm:$0xff] %v1364
    %1373 = vst [vmem:[%s9 + $0x20] sm:$0xff] %v1365
    %1374 = vst [vmem:[%s9 + $0x28] sm:$0xff] %v1366
    %1375 = vst [vmem:[%s9 + $0x30] sm:$0xff] %v1367
    %1376 = vst [vmem:[%s9 + $0x38] sm:$0xff] %v1368
    // Predicated region
    $region50: #{decoder_forward.1} parent=1 // pred_check
      _
    $region51: #{decoder_forward.1} parent=1 // pred_check_branch
      %1378 = sbr.rel (0) target = $region53
    $region52: #{decoder_forward.1} parent=1 // pred_region
      _
    $region53: #{decoder_forward.1} parent=1 // pred_fallthru
      _
    // Predicated region
    $region54: #{decoder_forward.1} parent=1 // pred_check
      _
    $region55: #{decoder_forward.1} parent=1 // pred_check_branch
      %1380 = sbr.rel (0) target = $region57
    $region56: #{decoder_forward.1} parent=1 // pred_region
      _
    $region57: #{decoder_forward.1} parent=1 // pred_fallthru
      _
    // Predicated region
    $region58: #{decoder_forward.1} parent=1 // pred_check
      _
    $region59: #{decoder_forward.1} parent=1 // pred_check_branch
      %1382 = sbr.rel (0) target = $region61
    $region60: #{decoder_forward.1} parent=1 // pred_region
      _
    $region61: #{decoder_forward.1} parent=1 // pred_fallthru
      _
    // Predicated region
    $region62: #{decoder_forward.1} parent=1 // pred_check
      _
    $region63: #{decoder_forward.1} parent=1 // pred_check_branch
      %1384 = sbr.rel (0) target = $region65
    $region64: #{decoder_forward.1} parent=1 // pred_region
      _
    $region65: #{decoder_forward.1} parent=1 // pred_fallthru
      _
    %1385 = vsyncpa [#allocation4], 1
    %1386 = vsyncpa [#allocation6], 1

</llo_original>
